<compile_context>
chip_gen: v7x
topology: tpu7x:2x2x1
jax: 0.10.0
libtpu: 0.0.40
codegen_flags: <defaults>
</compile_context>

<pallas_src>
import functools

import jax
import jax.numpy as jnp
import numpy as np
from jax.experimental import pallas as pl
from jax.experimental.pallas import tpu as pltpu


# ---------------------------------------------------------------------------
# Fused Pallas kernel: all LSTM layers + final Linear, everything VMEM-resident.
# ---------------------------------------------------------------------------
def _rnn_fused_kernel(num_layers, seq_len, batch_p, hidden, x_ref, *refs):
    """Single-invocation kernel (no grid).

    x_ref : (T*Bp, D)  time-major flattened input, row = t*Bp + b
    per layer l:
      wih_l : (Din_l, 4H)   fused W_ih^T   (gate blocks i, f, g, o along lanes)
      whh_l : (H, 4H)       fused W_hh^T
      b_l   : (1, 4H)       fused b_ih + b_hh
    fcw   : (H, O)   fc weight transposed
    fcb   : (1, O)
    out   : (Bp, O)
    scratch: seq (T*Bp, H), gx (T*Bp, 4H)   -- both f32
    """
    T, Bp, H = seq_len, batch_p, hidden
    base = 3 * num_layers

    layer_refs = refs[:base]
    fcw_ref = refs[base]
    fcb_ref = refs[base + 1]
    out_ref = refs[base + 2]
    seq_scr = refs[base + 3]
    gx_scr = refs[base + 4]

    # Lane mask selecting the 'g' gate block [2H, 3H) -> tanh; others sigmoid.
    lane = jax.lax.broadcasted_iota(jnp.int32, (Bp, 4 * H), 1)
    is_g_gate = jnp.logical_and(lane >= 2 * H, lane < 3 * H)

    h_final = None
    for layer in range(num_layers):
        wih = layer_refs[3 * layer][...]       # (Din, 4H)
        whh = layer_refs[3 * layer + 1][...]   # (H, 4H)   loop-invariant
        bias = layer_refs[3 * layer + 2][...]  # (1, 4H)

        # ---- hoisted input projection: ONE fused matmul over all T*Bp rows,
        # bias folded in, written lane-dense (4H = 128 for H = 32).
        inp = x_ref[...] if layer == 0 else seq_scr[...]       # (T*Bp, Din)
        gx_scr[...] = (
            jnp.dot(inp, wih, preferred_element_type=jnp.float32) + bias
        )

        # TODO(synk): pin `whh` in the MXU with pltpu.matmul_push_rhs and drive
        # the recurrence with matmul_acc_lhs/matmul_pop (same-RHS-many-LHS case).
        def step(t, carry, whh=whh, last_layer=(layer == num_layers - 1)):
            h_prev, c_prev = carry
            row = pl.multiple_of(t * Bp, Bp)                    # 8-aligned
            pre = gx_scr[pl.ds(row, Bp), :] + jnp.dot(
                h_prev, whh, preferred_element_type=jnp.float32
            )                                                   # (Bp, 4H)
            # Packed nonlinearities: 2 EUP passes + lane select.
            act = jnp.where(is_g_gate, jnp.tanh(pre), jax.nn.sigmoid(pre))
            i_g = act[:, 0 * H:1 * H]
            f_g = act[:, 1 * H:2 * H]
            g_g = act[:, 2 * H:3 * H]
            o_g = act[:, 3 * H:4 * H]
            c_new = f_g * c_prev + i_g * g_g
            h_new = o_g * jnp.tanh(c_new)
            if not last_layer:
                # Only needed as the next layer's input sequence.
                seq_scr[pl.ds(row, Bp), :] = h_new
            return (h_new, c_new)

        h0 = jnp.zeros((Bp, H), jnp.float32)
        c0 = jnp.zeros((Bp, H), jnp.float32)
        h_final, _ = jax.lax.fori_loop(0, T, step, (h0, c0),
                                       unroll=min(T, 8))

    # ---- final Linear on the last time step's hidden state (== out[:, -1, :])
    out_ref[...] = (
        jnp.dot(h_final, fcw_ref[...], preferred_element_type=jnp.float32)
        + fcb_ref[...]
    ).astype(out_ref.dtype)


# ---------------------------------------------------------------------------
# Wrappers
# ---------------------------------------------------------------------------
def prepare_params(lstm_params, fc_w, fc_b):
    """One-time (outside jit) weight re-layout into the kernel's fused format.

    PyTorch stacks gates i,f,g,o in blocks of H along dim 0 of w_ih/w_hh;
    transposing keeps that order along the lane (last) dim.
    """
    prepped = []
    for (w_ih, w_hh, b_ih, b_hh) in lstm_params:
        prepped.append(jnp.transpose(w_ih).astype(jnp.float32))        # (Din, 4H)
        prepped.append(jnp.transpose(w_hh).astype(jnp.float32))        # (H, 4H)
        prepped.append((b_ih + b_hh).reshape(1, -1).astype(jnp.float32))  # (1, 4H)
    prepped.append(jnp.transpose(fc_w).astype(jnp.float32))            # (H, O)
    prepped.append(fc_b.reshape(1, -1).astype(jnp.float32))            # (1, O)
    return tuple(prepped)


def _rnn_forward_impl(x, params, num_layers, hidden_size, output_size):
    B, T, D = x.shape
    H = hidden_size
    Bp = max(8, ((B + 7) // 8) * 8)              # pad batch to sublane multiple

    x_p = jnp.pad(x.astype(jnp.float32), ((0, Bp - B), (0, 0), (0, 0)))
    x_tm = jnp.transpose(x_p, (1, 0, 2)).reshape(T * Bp, D)   # row = t*Bp + b

    kernel = functools.partial(_rnn_fused_kernel, num_layers, T, Bp, H)
    n_in = 1 + len(params)
    vmem = pltpu.MemorySpace.VMEM

    # Explicit VMEM budget: inputs + params + output + scratch, with headroom.
    n_bytes = 4 * (
        T * Bp * D
        + sum(int(np.prod(p.shape)) for p in params)
        + Bp * output_size
        + T * Bp * H            # seq scratch
        + T * Bp * 4 * H        # gx scratch
    )
    vmem_limit = int(max(2 * n_bytes + (2 << 20), 16 << 20))
    # TODO(synk): for production T, chunk the time axis (grid + emit_pipeline)
    # instead of raising this limit; 64 MiB physical cap on v7x.

    out = pl.pallas_call(
        kernel,
        out_shape=jax.ShapeDtypeStruct((Bp, output_size), jnp.float32),
        in_specs=[pl.BlockSpec(memory_space=vmem)] * n_in,
        out_specs=pl.BlockSpec(memory_space=vmem),
        scratch_shapes=[
            pltpu.VMEM((T * Bp, H), jnp.float32),       # previous layer's hidden seq
            pltpu.VMEM((T * Bp, 4 * H), jnp.float32),   # fused gate pre-activations
        ],
        compiler_params=pltpu.CompilerParams(vmem_limit_bytes=vmem_limit),
    )(x_tm, *params)
    return out[:B]


rnn_forward = jax.jit(
    _rnn_forward_impl,
    static_argnames=("num_layers", "hidden_size", "output_size"),
)


# ---------------------------------------------------------------------------
# Pure-JAX reference (mirrors torch.nn.LSTM + Linear semantics)
# ---------------------------------------------------------------------------
def rnn_reference(x, lstm_params, fc_w, fc_b):
    B = x.shape[0]
    x_tm = jnp.transpose(x, (1, 0, 2))
    for (w_ih, w_hh, b_ih, b_hh) in lstm_params:
        H = w_hh.shape[1]

        def step(carry, xt, w_ih=w_ih, w_hh=w_hh, b_ih=b_ih, b_hh=b_hh, H=H):
            h, c = carry
            gates = xt @ w_ih.T + h @ w_hh.T + b_ih + b_hh
            i = jax.nn.sigmoid(gates[:, 0 * H:1 * H])
            f = jax.nn.sigmoid(gates[:, 1 * H:2 * H])
            g = jnp.tanh(gates[:, 2 * H:3 * H])
            o = jax.nn.sigmoid(gates[:, 3 * H:4 * H])
            c = f * c + i * g
            h = o * jnp.tanh(c)
            return (h, c), h

        init = (jnp.zeros((B, H), jnp.float32), jnp.zeros((B, H), jnp.float32))
        _, hs = jax.lax.scan(step, init, x_tm)
        x_tm = hs
    return x_tm[-1] @ fc_w.T + fc_b


# ---------------------------------------------------------------------------
# Main
# ---------------------------------------------------------------------------
if __name__ == "__main__":
    B, T = 2, 8
    input_size, hidden_size, num_layers, output_size = 16, 32, 2, 4

    key = jax.random.PRNGKey(0)
    keys = jax.random.split(key, 4 * num_layers + 3)

    scale = 1.0 / np.sqrt(hidden_size)  # PyTorch default uniform(-1/sqrt(H), 1/sqrt(H))
    lstm_params = []
    for layer in range(num_layers):
        d_in = input_size if layer == 0 else hidden_size
        k0, k1, k2, k3 = keys[4 * layer: 4 * layer + 4]
        w_ih = jax.random.uniform(k0, (4 * hidden_size, d_in), jnp.float32, -scale, scale)
        w_hh = jax.random.uniform(k1, (4 * hidden_size, hidden_size), jnp.float32, -scale, scale)
        b_ih = jax.random.uniform(k2, (4 * hidden_size,), jnp.float32, -scale, scale)
        b_hh = jax.random.uniform(k3, (4 * hidden_size,), jnp.float32, -scale, scale)
        lstm_params.append((w_ih, w_hh, b_ih, b_hh))
    lstm_params = tuple(lstm_params)

    fc_w = jax.random.uniform(keys[-3], (output_size, hidden_size), jnp.float32, -scale, scale)
    fc_b = jax.random.uniform(keys[-2], (output_size,), jnp.float32, -scale, scale)

    x = jax.random.normal(keys[-1], (B, T, input_size), jnp.float32)

    params = prepare_params(lstm_params, fc_w, fc_b)   # one-time, outside jit

    out = rnn_forward(x, params, num_layers=num_layers,
                      hidden_size=hidden_size, output_size=output_size)
    out = jax.block_until_ready(out)

    ref = rnn_reference(x, lstm_params, fc_w, fc_b)
    np.testing.assert_allclose(np.asarray(out), np.asarray(ref), rtol=1e-5, atol=1e-5)

    assert out.shape == (B, output_size)
    print("KERNEL_OK")
</pallas_src>

<mosaic_0001>
module attributes {stable_mosaic.version = 11 : i64} {
  func.func @_rnn_fused_kernel(%arg0: memref<64x16xf32, #tpu.memory_space<vmem>>, %arg1: memref<16x128xf32, #tpu.memory_space<vmem>>, %arg2: memref<32x128xf32, #tpu.memory_space<vmem>>, %arg3: memref<1x128xf32, #tpu.memory_space<vmem>>, %arg4: memref<32x128xf32, #tpu.memory_space<vmem>>, %arg5: memref<32x128xf32, #tpu.memory_space<vmem>>, %arg6: memref<1x128xf32, #tpu.memory_space<vmem>>, %arg7: memref<32x4xf32, #tpu.memory_space<vmem>>, %arg8: memref<1x4xf32, #tpu.memory_space<vmem>>, %arg9: memref<8x4xf32, #tpu.memory_space<vmem>>, %arg10: memref<64x32xf32, #tpu.memory_space<vmem>>, %arg11: memref<64x128xf32, #tpu.memory_space<vmem>>) attributes {dimension_semantics = [], scalar_prefetch = 0 : i64, scratch_operands = 2 : i64, tpu.core_type = #tpu.core_type<tc>} {
    %0 = tpu.iota {dimensions = array<i32: 1>} : vector<8x128xi32>
    %c64_i32 = arith.constant 64 : i32
    %1 = vector.broadcast %c64_i32 : i32 to vector<8x128xi32>
    %2 = arith.cmpi sge, %0, %1 : vector<8x128xi32>
    %c96_i32 = arith.constant 96 : i32
    %3 = vector.broadcast %c96_i32 : i32 to vector<8x128xi32>
    %4 = arith.cmpi slt, %0, %3 : vector<8x128xi32>
    %5 = arith.andi %2, %4 : vector<8x128xi1>
    %c0 = arith.constant 0 : index
    %c0_0 = arith.constant 0 : index
    %6 = vector.load %arg1[%c0, %c0_0] : memref<16x128xf32, #tpu.memory_space<vmem>>, vector<16x128xf32>
    %c0_1 = arith.constant 0 : index
    %c0_2 = arith.constant 0 : index
    %7 = vector.load %arg2[%c0_1, %c0_2] : memref<32x128xf32, #tpu.memory_space<vmem>>, vector<32x128xf32>
    %c0_3 = arith.constant 0 : index
    %c0_4 = arith.constant 0 : index
    %8 = vector.load %arg3[%c0_3, %c0_4] : memref<1x128xf32, #tpu.memory_space<vmem>>, vector<1x128xf32>
    %c0_5 = arith.constant 0 : index
    %c0_6 = arith.constant 0 : index
    %9 = vector.load %arg0[%c0_5, %c0_6] : memref<64x16xf32, #tpu.memory_space<vmem>>, vector<64x16xf32>
    %cst = arith.constant dense<0.000000e+00> : vector<64x128xf32>
    %10 = tpu.matmul %9, %6, %cst {dimension_numbers = #tpu.dot_dimension_numbers<[1], [0], [0], [1], [0, 0, 1, 1], [], []>} : vector<64x16xf32>, vector<16x128xf32>, vector<64x128xf32> -> vector<64x128xf32>
    %11 = vector.broadcast %8 : vector<1x128xf32> to vector<64x128xf32>
    %12 = arith.addf %10, %11 : vector<64x128xf32>
    %c0_7 = arith.constant 0 : index
    %c0_8 = arith.constant 0 : index
    %13 = vector.load %arg11[%c0_7, %c0_8] : memref<64x128xf32, #tpu.memory_space<vmem>>, vector<64x128xf32>
    tpu.vector_store %arg11[%c0_7, %c0_8], %12 {strides = array<i32>} : memref<64x128xf32, #tpu.memory_space<vmem>>, vector<64x128xf32>,
    %cst_9 = arith.constant 0.000000e+00 : f32
    %14 = vector.broadcast %cst_9 : f32 to vector<8x32xf32>
    %cst_10 = arith.constant 0.000000e+00 : f32
    %15 = vector.broadcast %cst_10 : f32 to vector<8x32xf32>
    %c0_i32 = arith.constant 0 : i32
    %c8_i32 = arith.constant 8 : i32
    %16 = arith.muli %c0_i32, %c8_i32 : i32
    %17 = tpu.assume_multiple %16, 8 : i32
    %18 = arith.index_cast %17 : i32 to index
    %c0_11 = arith.constant 0 : index
    %19 = vector.load %arg11[%18, %c0_11] : memref<64x128xf32, #tpu.memory_space<vmem>>, vector<8x128xf32>
    %cst_12 = arith.constant dense<0.000000e+00> : vector<8x128xf32>
    %20 = tpu.matmul %14, %7, %cst_12 {dimension_numbers = #tpu.dot_dimension_numbers<[1], [0], [0], [1], [0, 0, 1, 1], [], []>} : vector<8x32xf32>, vector<32x128xf32>, vector<8x128xf32> -> vector<8x128xf32>
    %21 = arith.addf %19, %20 : vector<8x128xf32>
    %22 = math.tanh %21 : vector<8x128xf32>
    %23 = arith.negf %21 : vector<8x128xf32>
    %24 = math.exp %23 : vector<8x128xf32>
    %cst_13 = arith.constant 1.000000e+00 : f32
    %25 = vector.broadcast %cst_13 : f32 to vector<8x128xf32>
    %26 = arith.addf %25, %24 : vector<8x128xf32>
    %27 = arith.divf %25, %26 : vector<8x128xf32>
    %28 = arith.select %5, %22, %27 : vector<8x128xi1>, vector<8x128xf32>
    %29 = vector.extract_strided_slice %28 {offsets = [0, 0], sizes = [8, 32], strides = [1, 1]} : vector<8x128xf32> to vector<8x32xf32>
    %30 = vector.extract_strided_slice %28 {offsets = [0, 32], sizes = [8, 32], strides = [1, 1]} : vector<8x128xf32> to vector<8x32xf32>
    %31 = vector.extract_strided_slice %28 {offsets = [0, 64], sizes = [8, 32], strides = [1, 1]} : vector<8x128xf32> to vector<8x32xf32>
    %32 = vector.extract_strided_slice %28 {offsets = [0, 96], sizes = [8, 32], strides = [1, 1]} : vector<8x128xf32> to vector<8x32xf32>
    %33 = arith.mulf %30, %15 : vector<8x32xf32>
    %34 = arith.mulf %29, %31 : vector<8x32xf32>
    %35 = arith.addf %33, %34 : vector<8x32xf32>
    %36 = math.tanh %35 : vector<8x32xf32>
    %37 = arith.mulf %32, %36 : vector<8x32xf32>
    %38 = arith.index_cast %17 : i32 to index
    %c0_14 = arith.constant 0 : index
    %39 = vector.load %arg10[%38, %c0_14] : memref<64x32xf32, #tpu.memory_space<vmem>>, vector<8x32xf32>
    tpu.vector_store %arg10[%38, %c0_14], %37 {strides = array<i32>} : memref<64x32xf32, #tpu.memory_space<vmem>>, vector<8x32xf32>,
    %c1_i32 = arith.constant 1 : i32
    %c8_i32_15 = arith.constant 8 : i32
    %40 = arith.muli %c1_i32, %c8_i32_15 : i32
    %41 = tpu.assume_multiple %40, 8 : i32
    %42 = arith.index_cast %41 : i32 to index
    %c0_16 = arith.constant 0 : index
    %43 = vector.load %arg11[%42, %c0_16] : memref<64x128xf32, #tpu.memory_space<vmem>>, vector<8x128xf32>
    %cst_17 = arith.constant dense<0.000000e+00> : vector<8x128xf32>
    %44 = tpu.matmul %37, %7, %cst_17 {dimension_numbers = #tpu.dot_dimension_numbers<[1], [0], [0], [1], [0, 0, 1, 1], [], []>} : vector<8x32xf32>, vector<32x128xf32>, vector<8x128xf32> -> vector<8x128xf32>
    %45 = arith.addf %43, %44 : vector<8x128xf32>
    %46 = math.tanh %45 : vector<8x128xf32>
    %47 = arith.negf %45 : vector<8x128xf32>
    %48 = math.exp %47 : vector<8x128xf32>
    %cst_18 = arith.constant 1.000000e+00 : f32
    %49 = vector.broadcast %cst_18 : f32 to vector<8x128xf32>
    %50 = arith.addf %49, %48 : vector<8x128xf32>
    %51 = arith.divf %49, %50 : vector<8x128xf32>
    %52 = arith.select %5, %46, %51 : vector<8x128xi1>, vector<8x128xf32>
    %53 = vector.extract_strided_slice %52 {offsets = [0, 0], sizes = [8, 32], strides = [1, 1]} : vector<8x128xf32> to vector<8x32xf32>
    %54 = vector.extract_strided_slice %52 {offsets = [0, 32], sizes = [8, 32], strides = [1, 1]} : vector<8x128xf32> to vector<8x32xf32>
    %55 = vector.extract_strided_slice %52 {offsets = [0, 64], sizes = [8, 32], strides = [1, 1]} : vector<8x128xf32> to vector<8x32xf32>
    %56 = vector.extract_strided_slice %52 {offsets = [0, 96], sizes = [8, 32], strides = [1, 1]} : vector<8x128xf32> to vector<8x32xf32>
    %57 = arith.mulf %54, %35 : vector<8x32xf32>
    %58 = arith.mulf %53, %55 : vector<8x32xf32>
    %59 = arith.addf %57, %58 : vector<8x32xf32>
    %60 = math.tanh %59 : vector<8x32xf32>
    %61 = arith.mulf %56, %60 : vector<8x32xf32>
    %62 = arith.index_cast %41 : i32 to index
    %c0_19 = arith.constant 0 : index
    %63 = vector.load %arg10[%62, %c0_19] : memref<64x32xf32, #tpu.memory_space<vmem>>, vector<8x32xf32>
    tpu.vector_store %arg10[%62, %c0_19], %61 {strides = array<i32>} : memref<64x32xf32, #tpu.memory_space<vmem>>, vector<8x32xf32>,
    %c2_i32 = arith.constant 2 : i32
    %c8_i32_20 = arith.constant 8 : i32
    %64 = arith.muli %c2_i32, %c8_i32_20 : i32
    %65 = tpu.assume_multiple %64, 8 : i32
    %66 = arith.index_cast %65 : i32 to index
    %c0_21 = arith.constant 0 : index
    %67 = vector.load %arg11[%66, %c0_21] : memref<64x128xf32, #tpu.memory_space<vmem>>, vector<8x128xf32>
    %cst_22 = arith.constant dense<0.000000e+00> : vector<8x128xf32>
    %68 = tpu.matmul %61, %7, %cst_22 {dimension_numbers = #tpu.dot_dimension_numbers<[1], [0], [0], [1], [0, 0, 1, 1], [], []>} : vector<8x32xf32>, vector<32x128xf32>, vector<8x128xf32> -> vector<8x128xf32>
    %69 = arith.addf %67, %68 : vector<8x128xf32>
    %70 = math.tanh %69 : vector<8x128xf32>
    %71 = arith.negf %69 : vector<8x128xf32>
    %72 = math.exp %71 : vector<8x128xf32>
    %cst_23 = arith.constant 1.000000e+00 : f32
    %73 = vector.broadcast %cst_23 : f32 to vector<8x128xf32>
    %74 = arith.addf %73, %72 : vector<8x128xf32>
    %75 = arith.divf %73, %74 : vector<8x128xf32>
    %76 = arith.select %5, %70, %75 : vector<8x128xi1>, vector<8x128xf32>
    %77 = vector.extract_strided_slice %76 {offsets = [0, 0], sizes = [8, 32], strides = [1, 1]} : vector<8x128xf32> to vector<8x32xf32>
    %78 = vector.extract_strided_slice %76 {offsets = [0, 32], sizes = [8, 32], strides = [1, 1]} : vector<8x128xf32> to vector<8x32xf32>
    %79 = vector.extract_strided_slice %76 {offsets = [0, 64], sizes = [8, 32], strides = [1, 1]} : vector<8x128xf32> to vector<8x32xf32>
    %80 = vector.extract_strided_slice %76 {offsets = [0, 96], sizes = [8, 32], strides = [1, 1]} : vector<8x128xf32> to vector<8x32xf32>
    %81 = arith.mulf %78, %59 : vector<8x32xf32>
    %82 = arith.mulf %77, %79 : vector<8x32xf32>
    %83 = arith.addf %81, %82 : vector<8x32xf32>
    %84 = math.tanh %83 : vector<8x32xf32>
    %85 = arith.mulf %80, %84 : vector<8x32xf32>
    %86 = arith.index_cast %65 : i32 to index
    %c0_24 = arith.constant 0 : index
    %87 = vector.load %arg10[%86, %c0_24] : memref<64x32xf32, #tpu.memory_space<vmem>>, vector<8x32xf32>
    tpu.vector_store %arg10[%86, %c0_24], %85 {strides = array<i32>} : memref<64x32xf32, #tpu.memory_space<vmem>>, vector<8x32xf32>,
    %c3_i32 = arith.constant 3 : i32
    %c8_i32_25 = arith.constant 8 : i32
    %88 = arith.muli %c3_i32, %c8_i32_25 : i32
    %89 = tpu.assume_multiple %88, 8 : i32
    %90 = arith.index_cast %89 : i32 to index
    %c0_26 = arith.constant 0 : index
    %91 = vector.load %arg11[%90, %c0_26] : memref<64x128xf32, #tpu.memory_space<vmem>>, vector<8x128xf32>
    %cst_27 = arith.constant dense<0.000000e+00> : vector<8x128xf32>
    %92 = tpu.matmul %85, %7, %cst_27 {dimension_numbers = #tpu.dot_dimension_numbers<[1], [0], [0], [1], [0, 0, 1, 1], [], []>} : vector<8x32xf32>, vector<32x128xf32>, vector<8x128xf32> -> vector<8x128xf32>
    %93 = arith.addf %91, %92 : vector<8x128xf32>
    %94 = math.tanh %93 : vector<8x128xf32>
    %95 = arith.negf %93 : vector<8x128xf32>
    %96 = math.exp %95 : vector<8x128xf32>
    %cst_28 = arith.constant 1.000000e+00 : f32
    %97 = vector.broadcast %cst_28 : f32 to vector<8x128xf32>
    %98 = arith.addf %97, %96 : vector<8x128xf32>
    %99 = arith.divf %97, %98 : vector<8x128xf32>
    %100 = arith.select %5, %94, %99 : vector<8x128xi1>, vector<8x128xf32>
    %101 = vector.extract_strided_slice %100 {offsets = [0, 0], sizes = [8, 32], strides = [1, 1]} : vector<8x128xf32> to vector<8x32xf32>
    %102 = vector.extract_strided_slice %100 {offsets = [0, 32], sizes = [8, 32], strides = [1, 1]} : vector<8x128xf32> to vector<8x32xf32>
    %103 = vector.extract_strided_slice %100 {offsets = [0, 64], sizes = [8, 32], strides = [1, 1]} : vector<8x128xf32> to vector<8x32xf32>
    %104 = vector.extract_strided_slice %100 {offsets = [0, 96], sizes = [8, 32], strides = [1, 1]} : vector<8x128xf32> to vector<8x32xf32>
    %105 = arith.mulf %102, %83 : vector<8x32xf32>
    %106 = arith.mulf %101, %103 : vector<8x32xf32>
    %107 = arith.addf %105, %106 : vector<8x32xf32>
    %108 = math.tanh %107 : vector<8x32xf32>
    %109 = arith.mulf %104, %108 : vector<8x32xf32>
    %110 = arith.index_cast %89 : i32 to index
    %c0_29 = arith.constant 0 : index
    %111 = vector.load %arg10[%110, %c0_29] : memref<64x32xf32, #tpu.memory_space<vmem>>, vector<8x32xf32>
    tpu.vector_store %arg10[%110, %c0_29], %109 {strides = array<i32>} : memref<64x32xf32, #tpu.memory_space<vmem>>, vector<8x32xf32>,
    %c4_i32 = arith.constant 4 : i32
    %c8_i32_30 = arith.constant 8 : i32
    %112 = arith.muli %c4_i32, %c8_i32_30 : i32
    %113 = tpu.assume_multiple %112, 8 : i32
    %114 = arith.index_cast %113 : i32 to index
    %c0_31 = arith.constant 0 : index
    %115 = vector.load %arg11[%114, %c0_31] : memref<64x128xf32, #tpu.memory_space<vmem>>, vector<8x128xf32>
    %cst_32 = arith.constant dense<0.000000e+00> : vector<8x128xf32>
    %116 = tpu.matmul %109, %7, %cst_32 {dimension_numbers = #tpu.dot_dimension_numbers<[1], [0], [0], [1], [0, 0, 1, 1], [], []>} : vector<8x32xf32>, vector<32x128xf32>, vector<8x128xf32> -> vector<8x128xf32>
    %117 = arith.addf %115, %116 : vector<8x128xf32>
    %118 = math.tanh %117 : vector<8x128xf32>
    %119 = arith.negf %117 : vector<8x128xf32>
    %120 = math.exp %119 : vector<8x128xf32>
    %cst_33 = arith.constant 1.000000e+00 : f32
    %121 = vector.broadcast %cst_33 : f32 to vector<8x128xf32>
    %122 = arith.addf %121, %120 : vector<8x128xf32>
    %123 = arith.divf %121, %122 : vector<8x128xf32>
    %124 = arith.select %5, %118, %123 : vector<8x128xi1>, vector<8x128xf32>
    %125 = vector.extract_strided_slice %124 {offsets = [0, 0], sizes = [8, 32], strides = [1, 1]} : vector<8x128xf32> to vector<8x32xf32>
    %126 = vector.extract_strided_slice %124 {offsets = [0, 32], sizes = [8, 32], strides = [1, 1]} : vector<8x128xf32> to vector<8x32xf32>
    %127 = vector.extract_strided_slice %124 {offsets = [0, 64], sizes = [8, 32], strides = [1, 1]} : vector<8x128xf32> to vector<8x32xf32>
    %128 = vector.extract_strided_slice %124 {offsets = [0, 96], sizes = [8, 32], strides = [1, 1]} : vector<8x128xf32> to vector<8x32xf32>
    %129 = arith.mulf %126, %107 : vector<8x32xf32>
    %130 = arith.mulf %125, %127 : vector<8x32xf32>
    %131 = arith.addf %129, %130 : vector<8x32xf32>
    %132 = math.tanh %131 : vector<8x32xf32>
    %133 = arith.mulf %128, %132 : vector<8x32xf32>
    %134 = arith.index_cast %113 : i32 to index
    %c0_34 = arith.constant 0 : index
    %135 = vector.load %arg10[%134, %c0_34] : memref<64x32xf32, #tpu.memory_space<vmem>>, vector<8x32xf32>
    tpu.vector_store %arg10[%134, %c0_34], %133 {strides = array<i32>} : memref<64x32xf32, #tpu.memory_space<vmem>>, vector<8x32xf32>,
    %c5_i32 = arith.constant 5 : i32
    %c8_i32_35 = arith.constant 8 : i32
    %136 = arith.muli %c5_i32, %c8_i32_35 : i32
    %137 = tpu.assume_multiple %136, 8 : i32
    %138 = arith.index_cast %137 : i32 to index
    %c0_36 = arith.constant 0 : index
    %139 = vector.load %arg11[%138, %c0_36] : memref<64x128xf32, #tpu.memory_space<vmem>>, vector<8x128xf32>
    %cst_37 = arith.constant dense<0.000000e+00> : vector<8x128xf32>
    %140 = tpu.matmul %133, %7, %cst_37 {dimension_numbers = #tpu.dot_dimension_numbers<[1], [0], [0], [1], [0, 0, 1, 1], [], []>} : vector<8x32xf32>, vector<32x128xf32>, vector<8x128xf32> -> vector<8x128xf32>
    %141 = arith.addf %139, %140 : vector<8x128xf32>
    %142 = math.tanh %141 : vector<8x128xf32>
    %143 = arith.negf %141 : vector<8x128xf32>
    %144 = math.exp %143 : vector<8x128xf32>
    %cst_38 = arith.constant 1.000000e+00 : f32
    %145 = vector.broadcast %cst_38 : f32 to vector<8x128xf32>
    %146 = arith.addf %145, %144 : vector<8x128xf32>
    %147 = arith.divf %145, %146 : vector<8x128xf32>
    %148 = arith.select %5, %142, %147 : vector<8x128xi1>, vector<8x128xf32>
    %149 = vector.extract_strided_slice %148 {offsets = [0, 0], sizes = [8, 32], strides = [1, 1]} : vector<8x128xf32> to vector<8x32xf32>
    %150 = vector.extract_strided_slice %148 {offsets = [0, 32], sizes = [8, 32], strides = [1, 1]} : vector<8x128xf32> to vector<8x32xf32>
    %151 = vector.extract_strided_slice %148 {offsets = [0, 64], sizes = [8, 32], strides = [1, 1]} : vector<8x128xf32> to vector<8x32xf32>
    %152 = vector.extract_strided_slice %148 {offsets = [0, 96], sizes = [8, 32], strides = [1, 1]} : vector<8x128xf32> to vector<8x32xf32>
    %153 = arith.mulf %150, %131 : vector<8x32xf32>
    %154 = arith.mulf %149, %151 : vector<8x32xf32>
    %155 = arith.addf %153, %154 : vector<8x32xf32>
    %156 = math.tanh %155 : vector<8x32xf32>
    %157 = arith.mulf %152, %156 : vector<8x32xf32>
    %158 = arith.index_cast %137 : i32 to index
    %c0_39 = arith.constant 0 : index
    %159 = vector.load %arg10[%158, %c0_39] : memref<64x32xf32, #tpu.memory_space<vmem>>, vector<8x32xf32>
    tpu.vector_store %arg10[%158, %c0_39], %157 {strides = array<i32>} : memref<64x32xf32, #tpu.memory_space<vmem>>, vector<8x32xf32>,
    %c6_i32 = arith.constant 6 : i32
    %c8_i32_40 = arith.constant 8 : i32
    %160 = arith.muli %c6_i32, %c8_i32_40 : i32
    %161 = tpu.assume_multiple %160, 8 : i32
    %162 = arith.index_cast %161 : i32 to index
    %c0_41 = arith.constant 0 : index
    %163 = vector.load %arg11[%162, %c0_41] : memref<64x128xf32, #tpu.memory_space<vmem>>, vector<8x128xf32>
    %cst_42 = arith.constant dense<0.000000e+00> : vector<8x128xf32>
    %164 = tpu.matmul %157, %7, %cst_42 {dimension_numbers = #tpu.dot_dimension_numbers<[1], [0], [0], [1], [0, 0, 1, 1], [], []>} : vector<8x32xf32>, vector<32x128xf32>, vector<8x128xf32> -> vector<8x128xf32>
    %165 = arith.addf %163, %164 : vector<8x128xf32>
    %166 = math.tanh %165 : vector<8x128xf32>
    %167 = arith.negf %165 : vector<8x128xf32>
    %168 = math.exp %167 : vector<8x128xf32>
    %cst_43 = arith.constant 1.000000e+00 : f32
    %169 = vector.broadcast %cst_43 : f32 to vector<8x128xf32>
    %170 = arith.addf %169, %168 : vector<8x128xf32>
    %171 = arith.divf %169, %170 : vector<8x128xf32>
    %172 = arith.select %5, %166, %171 : vector<8x128xi1>, vector<8x128xf32>
    %173 = vector.extract_strided_slice %172 {offsets = [0, 0], sizes = [8, 32], strides = [1, 1]} : vector<8x128xf32> to vector<8x32xf32>
    %174 = vector.extract_strided_slice %172 {offsets = [0, 32], sizes = [8, 32], strides = [1, 1]} : vector<8x128xf32> to vector<8x32xf32>
    %175 = vector.extract_strided_slice %172 {offsets = [0, 64], sizes = [8, 32], strides = [1, 1]} : vector<8x128xf32> to vector<8x32xf32>
    %176 = vector.extract_strided_slice %172 {offsets = [0, 96], sizes = [8, 32], strides = [1, 1]} : vector<8x128xf32> to vector<8x32xf32>
    %177 = arith.mulf %174, %155 : vector<8x32xf32>
    %178 = arith.mulf %173, %175 : vector<8x32xf32>
    %179 = arith.addf %177, %178 : vector<8x32xf32>
    %180 = math.tanh %179 : vector<8x32xf32>
    %181 = arith.mulf %176, %180 : vector<8x32xf32>
    %182 = arith.index_cast %161 : i32 to index
    %c0_44 = arith.constant 0 : index
    %183 = vector.load %arg10[%182, %c0_44] : memref<64x32xf32, #tpu.memory_space<vmem>>, vector<8x32xf32>
    tpu.vector_store %arg10[%182, %c0_44], %181 {strides = array<i32>} : memref<64x32xf32, #tpu.memory_space<vmem>>, vector<8x32xf32>,
    %c7_i32 = arith.constant 7 : i32
    %c8_i32_45 = arith.constant 8 : i32
    %184 = arith.muli %c7_i32, %c8_i32_45 : i32
    %185 = tpu.assume_multiple %184, 8 : i32
    %186 = arith.index_cast %185 : i32 to index
    %c0_46 = arith.constant 0 : index
    %187 = vector.load %arg11[%186, %c0_46] : memref<64x128xf32, #tpu.memory_space<vmem>>, vector<8x128xf32>
    %cst_47 = arith.constant dense<0.000000e+00> : vector<8x128xf32>
    %188 = tpu.matmul %181, %7, %cst_47 {dimension_numbers = #tpu.dot_dimension_numbers<[1], [0], [0], [1], [0, 0, 1, 1], [], []>} : vector<8x32xf32>, vector<32x128xf32>, vector<8x128xf32> -> vector<8x128xf32>
    %189 = arith.addf %187, %188 : vector<8x128xf32>
    %190 = math.tanh %189 : vector<8x128xf32>
    %191 = arith.negf %189 : vector<8x128xf32>
    %192 = math.exp %191 : vector<8x128xf32>
    %cst_48 = arith.constant 1.000000e+00 : f32
    %193 = vector.broadcast %cst_48 : f32 to vector<8x128xf32>
    %194 = arith.addf %193, %192 : vector<8x128xf32>
    %195 = arith.divf %193, %194 : vector<8x128xf32>
    %196 = arith.select %5, %190, %195 : vector<8x128xi1>, vector<8x128xf32>
    %197 = vector.extract_strided_slice %196 {offsets = [0, 0], sizes = [8, 32], strides = [1, 1]} : vector<8x128xf32> to vector<8x32xf32>
    %198 = vector.extract_strided_slice %196 {offsets = [0, 32], sizes = [8, 32], strides = [1, 1]} : vector<8x128xf32> to vector<8x32xf32>
    %199 = vector.extract_strided_slice %196 {offsets = [0, 64], sizes = [8, 32], strides = [1, 1]} : vector<8x128xf32> to vector<8x32xf32>
    %200 = vector.extract_strided_slice %196 {offsets = [0, 96], sizes = [8, 32], strides = [1, 1]} : vector<8x128xf32> to vector<8x32xf32>
    %201 = arith.mulf %198, %179 : vector<8x32xf32>
    %202 = arith.mulf %197, %199 : vector<8x32xf32>
    %203 = arith.addf %201, %202 : vector<8x32xf32>
    %204 = math.tanh %203 : vector<8x32xf32>
    %205 = arith.mulf %200, %204 : vector<8x32xf32>
    %206 = arith.index_cast %185 : i32 to index
    %c0_49 = arith.constant 0 : index
    %207 = vector.load %arg10[%206, %c0_49] : memref<64x32xf32, #tpu.memory_space<vmem>>, vector<8x32xf32>
    tpu.vector_store %arg10[%206, %c0_49], %205 {strides = array<i32>} : memref<64x32xf32, #tpu.memory_space<vmem>>, vector<8x32xf32>,
    %c8_i32_50 = arith.constant 8 : i32
    %c0_51 = arith.constant 0 : index
    %c0_52 = arith.constant 0 : index
    %208 = vector.load %arg4[%c0_51, %c0_52] : memref<32x128xf32, #tpu.memory_space<vmem>>, vector<32x128xf32>
    %c0_53 = arith.constant 0 : index
    %c0_54 = arith.constant 0 : index
    %209 = vector.load %arg5[%c0_53, %c0_54] : memref<32x128xf32, #tpu.memory_space<vmem>>, vector<32x128xf32>
    %c0_55 = arith.constant 0 : index
    %c0_56 = arith.constant 0 : index
    %210 = vector.load %arg6[%c0_55, %c0_56] : memref<1x128xf32, #tpu.memory_space<vmem>>, vector<1x128xf32>
    %c0_57 = arith.constant 0 : index
    %c0_58 = arith.constant 0 : index
    %211 = vector.load %arg10[%c0_57, %c0_58] : memref<64x32xf32, #tpu.memory_space<vmem>>, vector<64x32xf32>
    %cst_59 = arith.constant dense<0.000000e+00> : vector<64x128xf32>
    %212 = tpu.matmul %211, %208, %cst_59 {dimension_numbers = #tpu.dot_dimension_numbers<[1], [0], [0], [1], [0, 0, 1, 1], [], []>} : vector<64x32xf32>, vector<32x128xf32>, vector<64x128xf32> -> vector<64x128xf32>
    %213 = vector.broadcast %210 : vector<1x128xf32> to vector<64x128xf32>
    %214 = arith.addf %212, %213 : vector<64x128xf32>
    %c0_60 = arith.constant 0 : index
    %c0_61 = arith.constant 0 : index
    %215 = vector.load %arg11[%c0_60, %c0_61] : memref<64x128xf32, #tpu.memory_space<vmem>>, vector<64x128xf32>
    tpu.vector_store %arg11[%c0_60, %c0_61], %214 {strides = array<i32>} : memref<64x128xf32, #tpu.memory_space<vmem>>, vector<64x128xf32>,
    %cst_62 = arith.constant 0.000000e+00 : f32
    %216 = vector.broadcast %cst_62 : f32 to vector<8x32xf32>
    %cst_63 = arith.constant 0.000000e+00 : f32
    %217 = vector.broadcast %cst_63 : f32 to vector<8x32xf32>
    %c0_i32_64 = arith.constant 0 : i32
    %c8_i32_65 = arith.constant 8 : i32
    %218 = arith.muli %c0_i32_64, %c8_i32_65 : i32
    %219 = tpu.assume_multiple %218, 8 : i32
    %220 = arith.index_cast %219 : i32 to index
    %c0_66 = arith.constant 0 : index
    %221 = vector.load %arg11[%220, %c0_66] : memref<64x128xf32, #tpu.memory_space<vmem>>, vector<8x128xf32>
    %cst_67 = arith.constant dense<0.000000e+00> : vector<8x128xf32>
    %222 = tpu.matmul %216, %209, %cst_67 {dimension_numbers = #tpu.dot_dimension_numbers<[1], [0], [0], [1], [0, 0, 1, 1], [], []>} : vector<8x32xf32>, vector<32x128xf32>, vector<8x128xf32> -> vector<8x128xf32>
    %223 = arith.addf %221, %222 : vector<8x128xf32>
    %224 = math.tanh %223 : vector<8x128xf32>
    %225 = arith.negf %223 : vector<8x128xf32>
    %226 = math.exp %225 : vector<8x128xf32>
    %cst_68 = arith.constant 1.000000e+00 : f32
    %227 = vector.broadcast %cst_68 : f32 to vector<8x128xf32>
    %228 = arith.addf %227, %226 : vector<8x128xf32>
    %229 = arith.divf %227, %228 : vector<8x128xf32>
    %230 = arith.select %5, %224, %229 : vector<8x128xi1>, vector<8x128xf32>
    %231 = vector.extract_strided_slice %230 {offsets = [0, 0], sizes = [8, 32], strides = [1, 1]} : vector<8x128xf32> to vector<8x32xf32>
    %232 = vector.extract_strided_slice %230 {offsets = [0, 32], sizes = [8, 32], strides = [1, 1]} : vector<8x128xf32> to vector<8x32xf32>
    %233 = vector.extract_strided_slice %230 {offsets = [0, 64], sizes = [8, 32], strides = [1, 1]} : vector<8x128xf32> to vector<8x32xf32>
    %234 = vector.extract_strided_slice %230 {offsets = [0, 96], sizes = [8, 32], strides = [1, 1]} : vector<8x128xf32> to vector<8x32xf32>
    %235 = arith.mulf %232, %217 : vector<8x32xf32>
    %236 = arith.mulf %231, %233 : vector<8x32xf32>
    %237 = arith.addf %235, %236 : vector<8x32xf32>
    %238 = math.tanh %237 : vector<8x32xf32>
    %239 = arith.mulf %234, %238 : vector<8x32xf32>
    %c1_i32_69 = arith.constant 1 : i32
    %c8_i32_70 = arith.constant 8 : i32
    %240 = arith.muli %c1_i32_69, %c8_i32_70 : i32
    %241 = tpu.assume_multiple %240, 8 : i32
    %242 = arith.index_cast %241 : i32 to index
    %c0_71 = arith.constant 0 : index
    %243 = vector.load %arg11[%242, %c0_71] : memref<64x128xf32, #tpu.memory_space<vmem>>, vector<8x128xf32>
    %cst_72 = arith.constant dense<0.000000e+00> : vector<8x128xf32>
    %244 = tpu.matmul %239, %209, %cst_72 {dimension_numbers = #tpu.dot_dimension_numbers<[1], [0], [0], [1], [0, 0, 1, 1], [], []>} : vector<8x32xf32>, vector<32x128xf32>, vector<8x128xf32> -> vector<8x128xf32>
    %245 = arith.addf %243, %244 : vector<8x128xf32>
    %246 = math.tanh %245 : vector<8x128xf32>
    %247 = arith.negf %245 : vector<8x128xf32>
    %248 = math.exp %247 : vector<8x128xf32>
    %cst_73 = arith.constant 1.000000e+00 : f32
    %249 = vector.broadcast %cst_73 : f32 to vector<8x128xf32>
    %250 = arith.addf %249, %248 : vector<8x128xf32>
    %251 = arith.divf %249, %250 : vector<8x128xf32>
    %252 = arith.select %5, %246, %251 : vector<8x128xi1>, vector<8x128xf32>
    %253 = vector.extract_strided_slice %252 {offsets = [0, 0], sizes = [8, 32], strides = [1, 1]} : vector<8x128xf32> to vector<8x32xf32>
    %254 = vector.extract_strided_slice %252 {offsets = [0, 32], sizes = [8, 32], strides = [1, 1]} : vector<8x128xf32> to vector<8x32xf32>
    %255 = vector.extract_strided_slice %252 {offsets = [0, 64], sizes = [8, 32], strides = [1, 1]} : vector<8x128xf32> to vector<8x32xf32>
    %256 = vector.extract_strided_slice %252 {offsets = [0, 96], sizes = [8, 32], strides = [1, 1]} : vector<8x128xf32> to vector<8x32xf32>
    %257 = arith.mulf %254, %237 : vector<8x32xf32>
    %258 = arith.mulf %253, %255 : vector<8x32xf32>
    %259 = arith.addf %257, %258 : vector<8x32xf32>
    %260 = math.tanh %259 : vector<8x32xf32>
    %261 = arith.mulf %256, %260 : vector<8x32xf32>
    %c2_i32_74 = arith.constant 2 : i32
    %c8_i32_75 = arith.constant 8 : i32
    %262 = arith.muli %c2_i32_74, %c8_i32_75 : i32
    %263 = tpu.assume_multiple %262, 8 : i32
    %264 = arith.index_cast %263 : i32 to index
    %c0_76 = arith.constant 0 : index
    %265 = vector.load %arg11[%264, %c0_76] : memref<64x128xf32, #tpu.memory_space<vmem>>, vector<8x128xf32>
    %cst_77 = arith.constant dense<0.000000e+00> : vector<8x128xf32>
    %266 = tpu.matmul %261, %209, %cst_77 {dimension_numbers = #tpu.dot_dimension_numbers<[1], [0], [0], [1], [0, 0, 1, 1], [], []>} : vector<8x32xf32>, vector<32x128xf32>, vector<8x128xf32> -> vector<8x128xf32>
    %267 = arith.addf %265, %266 : vector<8x128xf32>
    %268 = math.tanh %267 : vector<8x128xf32>
    %269 = arith.negf %267 : vector<8x128xf32>
    %270 = math.exp %269 : vector<8x128xf32>
    %cst_78 = arith.constant 1.000000e+00 : f32
    %271 = vector.broadcast %cst_78 : f32 to vector<8x128xf32>
    %272 = arith.addf %271, %270 : vector<8x128xf32>
    %273 = arith.divf %271, %272 : vector<8x128xf32>
    %274 = arith.select %5, %268, %273 : vector<8x128xi1>, vector<8x128xf32>
    %275 = vector.extract_strided_slice %274 {offsets = [0, 0], sizes = [8, 32], strides = [1, 1]} : vector<8x128xf32> to vector<8x32xf32>
    %276 = vector.extract_strided_slice %274 {offsets = [0, 32], sizes = [8, 32], strides = [1, 1]} : vector<8x128xf32> to vector<8x32xf32>
    %277 = vector.extract_strided_slice %274 {offsets = [0, 64], sizes = [8, 32], strides = [1, 1]} : vector<8x128xf32> to vector<8x32xf32>
    %278 = vector.extract_strided_slice %274 {offsets = [0, 96], sizes = [8, 32], strides = [1, 1]} : vector<8x128xf32> to vector<8x32xf32>
    %279 = arith.mulf %276, %259 : vector<8x32xf32>
    %280 = arith.mulf %275, %277 : vector<8x32xf32>
    %281 = arith.addf %279, %280 : vector<8x32xf32>
    %282 = math.tanh %281 : vector<8x32xf32>
    %283 = arith.mulf %278, %282 : vector<8x32xf32>
    %c3_i32_79 = arith.constant 3 : i32
    %c8_i32_80 = arith.constant 8 : i32
    %284 = arith.muli %c3_i32_79, %c8_i32_80 : i32
    %285 = tpu.assume_multiple %284, 8 : i32
    %286 = arith.index_cast %285 : i32 to index
    %c0_81 = arith.constant 0 : index
    %287 = vector.load %arg11[%286, %c0_81] : memref<64x128xf32, #tpu.memory_space<vmem>>, vector<8x128xf32>
    %cst_82 = arith.constant dense<0.000000e+00> : vector<8x128xf32>
    %288 = tpu.matmul %283, %209, %cst_82 {dimension_numbers = #tpu.dot_dimension_numbers<[1], [0], [0], [1], [0, 0, 1, 1], [], []>} : vector<8x32xf32>, vector<32x128xf32>, vector<8x128xf32> -> vector<8x128xf32>
    %289 = arith.addf %287, %288 : vector<8x128xf32>
    %290 = math.tanh %289 : vector<8x128xf32>
    %291 = arith.negf %289 : vector<8x128xf32>
    %292 = math.exp %291 : vector<8x128xf32>
    %cst_83 = arith.constant 1.000000e+00 : f32
    %293 = vector.broadcast %cst_83 : f32 to vector<8x128xf32>
    %294 = arith.addf %293, %292 : vector<8x128xf32>
    %295 = arith.divf %293, %294 : vector<8x128xf32>
    %296 = arith.select %5, %290, %295 : vector<8x128xi1>, vector<8x128xf32>
    %297 = vector.extract_strided_slice %296 {offsets = [0, 0], sizes = [8, 32], strides = [1, 1]} : vector<8x128xf32> to vector<8x32xf32>
    %298 = vector.extract_strided_slice %296 {offsets = [0, 32], sizes = [8, 32], strides = [1, 1]} : vector<8x128xf32> to vector<8x32xf32>
    %299 = vector.extract_strided_slice %296 {offsets = [0, 64], sizes = [8, 32], strides = [1, 1]} : vector<8x128xf32> to vector<8x32xf32>
    %300 = vector.extract_strided_slice %296 {offsets = [0, 96], sizes = [8, 32], strides = [1, 1]} : vector<8x128xf32> to vector<8x32xf32>
    %301 = arith.mulf %298, %281 : vector<8x32xf32>
    %302 = arith.mulf %297, %299 : vector<8x32xf32>
    %303 = arith.addf %301, %302 : vector<8x32xf32>
    %304 = math.tanh %303 : vector<8x32xf32>
    %305 = arith.mulf %300, %304 : vector<8x32xf32>
    %c4_i32_84 = arith.constant 4 : i32
    %c8_i32_85 = arith.constant 8 : i32
    %306 = arith.muli %c4_i32_84, %c8_i32_85 : i32
    %307 = tpu.assume_multiple %306, 8 : i32
    %308 = arith.index_cast %307 : i32 to index
    %c0_86 = arith.constant 0 : index
    %309 = vector.load %arg11[%308, %c0_86] : memref<64x128xf32, #tpu.memory_space<vmem>>, vector<8x128xf32>
    %cst_87 = arith.constant dense<0.000000e+00> : vector<8x128xf32>
    %310 = tpu.matmul %305, %209, %cst_87 {dimension_numbers = #tpu.dot_dimension_numbers<[1], [0], [0], [1], [0, 0, 1, 1], [], []>} : vector<8x32xf32>, vector<32x128xf32>, vector<8x128xf32> -> vector<8x128xf32>
    %311 = arith.addf %309, %310 : vector<8x128xf32>
    %312 = math.tanh %311 : vector<8x128xf32>
    %313 = arith.negf %311 : vector<8x128xf32>
    %314 = math.exp %313 : vector<8x128xf32>
    %cst_88 = arith.constant 1.000000e+00 : f32
    %315 = vector.broadcast %cst_88 : f32 to vector<8x128xf32>
    %316 = arith.addf %315, %314 : vector<8x128xf32>
    %317 = arith.divf %315, %316 : vector<8x128xf32>
    %318 = arith.select %5, %312, %317 : vector<8x128xi1>, vector<8x128xf32>
    %319 = vector.extract_strided_slice %318 {offsets = [0, 0], sizes = [8, 32], strides = [1, 1]} : vector<8x128xf32> to vector<8x32xf32>
    %320 = vector.extract_strided_slice %318 {offsets = [0, 32], sizes = [8, 32], strides = [1, 1]} : vector<8x128xf32> to vector<8x32xf32>
    %321 = vector.extract_strided_slice %318 {offsets = [0, 64], sizes = [8, 32], strides = [1, 1]} : vector<8x128xf32> to vector<8x32xf32>
    %322 = vector.extract_strided_slice %318 {offsets = [0, 96], sizes = [8, 32], strides = [1, 1]} : vector<8x128xf32> to vector<8x32xf32>
    %323 = arith.mulf %320, %303 : vector<8x32xf32>
    %324 = arith.mulf %319, %321 : vector<8x32xf32>
    %325 = arith.addf %323, %324 : vector<8x32xf32>
    %326 = math.tanh %325 : vector<8x32xf32>
    %327 = arith.mulf %322, %326 : vector<8x32xf32>
    %c5_i32_89 = arith.constant 5 : i32
    %c8_i32_90 = arith.constant 8 : i32
    %328 = arith.muli %c5_i32_89, %c8_i32_90 : i32
    %329 = tpu.assume_multiple %328, 8 : i32
    %330 = arith.index_cast %329 : i32 to index
    %c0_91 = arith.constant 0 : index
    %331 = vector.load %arg11[%330, %c0_91] : memref<64x128xf32, #tpu.memory_space<vmem>>, vector<8x128xf32>
    %cst_92 = arith.constant dense<0.000000e+00> : vector<8x128xf32>
    %332 = tpu.matmul %327, %209, %cst_92 {dimension_numbers = #tpu.dot_dimension_numbers<[1], [0], [0], [1], [0, 0, 1, 1], [], []>} : vector<8x32xf32>, vector<32x128xf32>, vector<8x128xf32> -> vector<8x128xf32>
    %333 = arith.addf %331, %332 : vector<8x128xf32>
    %334 = math.tanh %333 : vector<8x128xf32>
    %335 = arith.negf %333 : vector<8x128xf32>
    %336 = math.exp %335 : vector<8x128xf32>
    %cst_93 = arith.constant 1.000000e+00 : f32
    %337 = vector.broadcast %cst_93 : f32 to vector<8x128xf32>
    %338 = arith.addf %337, %336 : vector<8x128xf32>
    %339 = arith.divf %337, %338 : vector<8x128xf32>
    %340 = arith.select %5, %334, %339 : vector<8x128xi1>, vector<8x128xf32>
    %341 = vector.extract_strided_slice %340 {offsets = [0, 0], sizes = [8, 32], strides = [1, 1]} : vector<8x128xf32> to vector<8x32xf32>
    %342 = vector.extract_strided_slice %340 {offsets = [0, 32], sizes = [8, 32], strides = [1, 1]} : vector<8x128xf32> to vector<8x32xf32>
    %343 = vector.extract_strided_slice %340 {offsets = [0, 64], sizes = [8, 32], strides = [1, 1]} : vector<8x128xf32> to vector<8x32xf32>
    %344 = vector.extract_strided_slice %340 {offsets = [0, 96], sizes = [8, 32], strides = [1, 1]} : vector<8x128xf32> to vector<8x32xf32>
    %345 = arith.mulf %342, %325 : vector<8x32xf32>
    %346 = arith.mulf %341, %343 : vector<8x32xf32>
    %347 = arith.addf %345, %346 : vector<8x32xf32>
    %348 = math.tanh %347 : vector<8x32xf32>
    %349 = arith.mulf %344, %348 : vector<8x32xf32>
    %c6_i32_94 = arith.constant 6 : i32
    %c8_i32_95 = arith.constant 8 : i32
    %350 = arith.muli %c6_i32_94, %c8_i32_95 : i32
    %351 = tpu.assume_multiple %350, 8 : i32
    %352 = arith.index_cast %351 : i32 to index
    %c0_96 = arith.constant 0 : index
    %353 = vector.load %arg11[%352, %c0_96] : memref<64x128xf32, #tpu.memory_space<vmem>>, vector<8x128xf32>
    %cst_97 = arith.constant dense<0.000000e+00> : vector<8x128xf32>
    %354 = tpu.matmul %349, %209, %cst_97 {dimension_numbers = #tpu.dot_dimension_numbers<[1], [0], [0], [1], [0, 0, 1, 1], [], []>} : vector<8x32xf32>, vector<32x128xf32>, vector<8x128xf32> -> vector<8x128xf32>
    %355 = arith.addf %353, %354 : vector<8x128xf32>
    %356 = math.tanh %355 : vector<8x128xf32>
    %357 = arith.negf %355 : vector<8x128xf32>
    %358 = math.exp %357 : vector<8x128xf32>
    %cst_98 = arith.constant 1.000000e+00 : f32
    %359 = vector.broadcast %cst_98 : f32 to vector<8x128xf32>
    %360 = arith.addf %359, %358 : vector<8x128xf32>
    %361 = arith.divf %359, %360 : vector<8x128xf32>
    %362 = arith.select %5, %356, %361 : vector<8x128xi1>, vector<8x128xf32>
    %363 = vector.extract_strided_slice %362 {offsets = [0, 0], sizes = [8, 32], strides = [1, 1]} : vector<8x128xf32> to vector<8x32xf32>
    %364 = vector.extract_strided_slice %362 {offsets = [0, 32], sizes = [8, 32], strides = [1, 1]} : vector<8x128xf32> to vector<8x32xf32>
    %365 = vector.extract_strided_slice %362 {offsets = [0, 64], sizes = [8, 32], strides = [1, 1]} : vector<8x128xf32> to vector<8x32xf32>
    %366 = vector.extract_strided_slice %362 {offsets = [0, 96], sizes = [8, 32], strides = [1, 1]} : vector<8x128xf32> to vector<8x32xf32>
    %367 = arith.mulf %364, %347 : vector<8x32xf32>
    %368 = arith.mulf %363, %365 : vector<8x32xf32>
    %369 = arith.addf %367, %368 : vector<8x32xf32>
    %370 = math.tanh %369 : vector<8x32xf32>
    %371 = arith.mulf %366, %370 : vector<8x32xf32>
    %c7_i32_99 = arith.constant 7 : i32
    %c8_i32_100 = arith.constant 8 : i32
    %372 = arith.muli %c7_i32_99, %c8_i32_100 : i32
    %373 = tpu.assume_multiple %372, 8 : i32
    %374 = arith.index_cast %373 : i32 to index
    %c0_101 = arith.constant 0 : index
    %375 = vector.load %arg11[%374, %c0_101] : memref<64x128xf32, #tpu.memory_space<vmem>>, vector<8x128xf32>
    %cst_102 = arith.constant dense<0.000000e+00> : vector<8x128xf32>
    %376 = tpu.matmul %371, %209, %cst_102 {dimension_numbers = #tpu.dot_dimension_numbers<[1], [0], [0], [1], [0, 0, 1, 1], [], []>} : vector<8x32xf32>, vector<32x128xf32>, vector<8x128xf32> -> vector<8x128xf32>
    %377 = arith.addf %375, %376 : vector<8x128xf32>
    %378 = math.tanh %377 : vector<8x128xf32>
    %379 = arith.negf %377 : vector<8x128xf32>
    %380 = math.exp %379 : vector<8x128xf32>
    %cst_103 = arith.constant 1.000000e+00 : f32
    %381 = vector.broadcast %cst_103 : f32 to vector<8x128xf32>
    %382 = arith.addf %381, %380 : vector<8x128xf32>
    %383 = arith.divf %381, %382 : vector<8x128xf32>
    %384 = arith.select %5, %378, %383 : vector<8x128xi1>, vector<8x128xf32>
    %385 = vector.extract_strided_slice %384 {offsets = [0, 0], sizes = [8, 32], strides = [1, 1]} : vector<8x128xf32> to vector<8x32xf32>
    %386 = vector.extract_strided_slice %384 {offsets = [0, 32], sizes = [8, 32], strides = [1, 1]} : vector<8x128xf32> to vector<8x32xf32>
    %387 = vector.extract_strided_slice %384 {offsets = [0, 64], sizes = [8, 32], strides = [1, 1]} : vector<8x128xf32> to vector<8x32xf32>
    %388 = vector.extract_strided_slice %384 {offsets = [0, 96], sizes = [8, 32], strides = [1, 1]} : vector<8x128xf32> to vector<8x32xf32>
    %389 = arith.mulf %386, %369 : vector<8x32xf32>
    %390 = arith.mulf %385, %387 : vector<8x32xf32>
    %391 = arith.addf %389, %390 : vector<8x32xf32>
    %392 = math.tanh %391 : vector<8x32xf32>
    %393 = arith.mulf %388, %392 : vector<8x32xf32>
    %c8_i32_104 = arith.constant 8 : i32
    %c0_105 = arith.constant 0 : index
    %c0_106 = arith.constant 0 : index
    %394 = vector.load %arg7[%c0_105, %c0_106] : memref<32x4xf32, #tpu.memory_space<vmem>>, vector<32x4xf32>
    %cst_107 = arith.constant dense<0.000000e+00> : vector<8x4xf32>
    %395 = tpu.matmul %393, %394, %cst_107 {dimension_numbers = #tpu.dot_dimension_numbers<[1], [0], [0], [1], [0, 0, 1, 1], [], []>} : vector<8x32xf32>, vector<32x4xf32>, vector<8x4xf32> -> vector<8x4xf32>
    %c0_108 = arith.constant 0 : index
    %c0_109 = arith.constant 0 : index
    %396 = vector.load %arg8[%c0_108, %c0_109] : memref<1x4xf32, #tpu.memory_space<vmem>>, vector<1x4xf32>
    %397 = vector.broadcast %396 : vector<1x4xf32> to vector<8x4xf32>
    %398 = arith.addf %395, %397 : vector<8x4xf32>
    %c0_110 = arith.constant 0 : index
    %c0_111 = arith.constant 0 : index
    %399 = vector.load %arg9[%c0_110, %c0_111] : memref<8x4xf32, #tpu.memory_space<vmem>>, vector<8x4xf32>
    tpu.vector_store %arg9[%c0_110, %c0_111], %398 {strides = array<i32>} : memref<8x4xf32, #tpu.memory_space<vmem>>, vector<8x4xf32>,
    return
  }
}

</mosaic_0001>

<llo_original>
// kernel: _rnn_forward_impl.1
$region0: #{_rnn_forward_impl.1}
  #allocation0 [shape = 'u32[]', space=smem, size = 0x4, offset = 0x4, fixed_abs, tag = 'smem constant byte address 0x4 - core index']
  #allocation1 [shape = 'u32[144,128]{1,0:T(1,128)}', space=vmem, size = 0x12000, scoped, tag = 'internal scratch']
  #allocation2 [shape = 'f32[64,32]{1,0:T(8,128)}', space=vmem, size = 0x8000, scoped, tag = 'scratch operand']
  #allocation3 [shape = 'f32[64,128]{1,0:T(8,128)}', space=vmem, size = 0x8000, scoped, tag = 'scratch operand']
  %s0 = inlined_call_operand.vmem [shape: f32[64,16], index: 0, kind: input, shape index: {}]
  %s1 = inlined_call_operand.vmem [shape: f32[16,128], index: 1, kind: input, shape index: {}]
  %s2 = inlined_call_operand.vmem [shape: f32[32,128], index: 2, kind: input, shape index: {}]
  %s3 = inlined_call_operand.vmem [shape: f32[1,128], index: 3, kind: input, shape index: {}]
  %s4 = inlined_call_operand.vmem [shape: f32[32,128], index: 4, kind: input, shape index: {}]
  %s5 = inlined_call_operand.vmem [shape: f32[32,128], index: 5, kind: input, shape index: {}]
  %s6 = inlined_call_operand.vmem [shape: f32[1,128], index: 6, kind: input, shape index: {}]
  %s7 = inlined_call_operand.vmem [shape: f32[32,4], index: 7, kind: input, shape index: {}]
  %s8 = inlined_call_operand.vmem [shape: f32[1,4], index: 8, kind: input, shape index: {}]
  %s9 = inlined_call_operand.vmem [shape: f32[8,4], index: 9, kind: output, shape index: {}]
  %s10 = sld [smem:[#allocation0]]
  $region46: #{_rnn_forward_impl.1} parent=0
    _
  %s12 = ssub.s32 1, %s10
  %s13 = scalar_select 0, %s12, %s10
  // Predicated region
  $region2: #{_rnn_forward_impl.1} parent=0 // pred_check
    _
  $region3: #{_rnn_forward_impl.1} parent=0 // pred_check_branch
    %15 = sbr.rel (0) target = $region5
  $region4: #{_rnn_forward_impl.1} parent=0 // pred_region
    _
  $region5: #{_rnn_forward_impl.1} parent=0 // pred_fallthru
    _
  // Predicated region
  $region6: #{_rnn_forward_impl.1} parent=0 // pred_check
    _
  $region7: #{_rnn_forward_impl.1} parent=0 // pred_check_branch
    %17 = sbr.rel (0) target = $region9
  $region8: #{_rnn_forward_impl.1} parent=0 // pred_region
    _
  $region9: #{_rnn_forward_impl.1} parent=0 // pred_fallthru
    _
  // Predicated region
  $region10: #{_rnn_forward_impl.1} parent=0 // pred_check
    _
  $region11: #{_rnn_forward_impl.1} parent=0 // pred_check_branch
    %19 = sbr.rel (0) target = $region13
  $region12: #{_rnn_forward_impl.1} parent=0 // pred_region
    _
  $region13: #{_rnn_forward_impl.1} parent=0 // pred_fallthru
    _
  // Predicated region
  $region14: #{_rnn_forward_impl.1} parent=0 // pred_check
    _
  $region15: #{_rnn_forward_impl.1} parent=0 // pred_check_branch
    %21 = sbr.rel (0) target = $region17
  $region16: #{_rnn_forward_impl.1} parent=0 // pred_region
    _
  $region17: #{_rnn_forward_impl.1} parent=0 // pred_fallthru
    _
  // Predicated region
  $region18: #{_rnn_forward_impl.1} parent=0 // pred_check
    _
  $region19: #{_rnn_forward_impl.1} parent=0 // pred_check_branch
    %23 = sbr.rel (0) target = $region21
  $region20: #{_rnn_forward_impl.1} parent=0 // pred_region
    _
  $region21: #{_rnn_forward_impl.1} parent=0 // pred_fallthru
    _
  // Predicated region
  $region22: #{_rnn_forward_impl.1} parent=0 // pred_check
    _
  $region23: #{_rnn_forward_impl.1} parent=0 // pred_check_branch
    %25 = sbr.rel (0) target = $region25
  $region24: #{_rnn_forward_impl.1} parent=0 // pred_region
    _
  $region25: #{_rnn_forward_impl.1} parent=0 // pred_fallthru
    _
  // Predicated region
  $region26: #{_rnn_forward_impl.1} parent=0 // pred_check
    _
  $region27: #{_rnn_forward_impl.1} parent=0 // pred_check_branch
    %27 = sbr.rel (0) target = $region29
  $region28: #{_rnn_forward_impl.1} parent=0 // pred_region
    _
  $region29: #{_rnn_forward_impl.1} parent=0 // pred_fallthru
    _
  // Predicated region
  $region30: #{_rnn_forward_impl.1} parent=0 // pred_check
    _
  $region31: #{_rnn_forward_impl.1} parent=0 // pred_check_branch
    %29 = sbr.rel (0) target = $region33
  $region32: #{_rnn_forward_impl.1} parent=0 // pred_region
    _
  $region33: #{_rnn_forward_impl.1} parent=0 // pred_fallthru
    _
  // Predicated region
  $region34: #{_rnn_forward_impl.1} parent=0 // pred_check
    _
  $region35: #{_rnn_forward_impl.1} parent=0 // pred_check_branch
    %31 = sbr.rel (0) target = $region37
  $region36: #{_rnn_forward_impl.1} parent=0 // pred_region
    _
  $region37: #{_rnn_forward_impl.1} parent=0 // pred_fallthru
    _
  %v32 = vlaneseq
  %v33 = vand.u32 %v32, 127
  %vm34 = vcmp.ge.s32.totalorder %v33, 64
  %vm35 = vcmp.lt.s32.totalorder %v33, 96
  %vm36 = vmand %vm34, %vm35
  %v37 = vld [vmem:[%s1] sm:$0xff]
  %v38 = vld [vmem:[%s1 + $0x8] sm:$0xff]
  %v39 = vld [vmem:[%s2] sm:$0xff]
  %v40 = vld [vmem:[%s2 + $0x8] sm:$0xff]
  %v41 = vld [vmem:[%s2 + $0x10] sm:$0xff]
  %v42 = vld [vmem:[%s2 + $0x18] sm:$0xff]
  %v43 = vld [vmem:[%s3] sm:$0x1]
  %v44 = vld [vmem:[%s0] sm:$0xff]
  %v45 = vld [vmem:[%s0 + $0x8] sm:$0xff]
  %v46 = vld [vmem:[%s0 + $0x10] sm:$0xff]
  %v47 = vld [vmem:[%s0 + $0x18] sm:$0xff]
  %v48 = vld [vmem:[%s0 + $0x20] sm:$0xff]
  %v49 = vld [vmem:[%s0 + $0x28] sm:$0xff]
  %v50 = vld [vmem:[%s0 + $0x30] sm:$0xff]
  %v51 = vld [vmem:[%s0 + $0x38] sm:$0xff]
  %v53 = vlaneseq
  %v54 = vshrl.u32 %v53, 7
  %v55 = vsub.s32 0, %v54
  %v56 = vrot.slane %v43, %v55
  %vm58 = vcmask 130048
  %v60 = vsel %vm58, %v44, 0
  %v63 = vsel %vm58, %v45, 0
  %v66 = vsel %vm58, %v46, 0
  %v69 = vsel %vm58, %v47, 0
  %v72 = vsel %vm58, %v48, 0
  %v75 = vsel %vm58, %v49, 0
  %v78 = vsel %vm58, %v50, 0
  %v81 = vsel %vm58, %v51, 0
  %83 = vmatprep.subr.mxu0 0.0
  %84 = vmatpush1.msra.mxu0 %v37
  %85 = vmatprep.subr.mxu0 0.0
  %86 = vmatpush1.msra.mxu0 %v38
  %87 = vmatprep.subr.mxu0 0.0
  %88 = vmatpush1.msra.mxu0 0.0
  %89 = vmatprep.subr.mxu0 0.0
  %90 = vmatpush1.msra.mxu0 0.0
  %91 = vmatprep.subr.mxu0 0.0
  %92 = vmatpush1.msra.mxu0 0.0
  %93 = vmatprep.subr.mxu0 0.0
  %94 = vmatpush1.msra.mxu0 0.0
  %95 = vmatprep.subr.mxu0 0.0
  %96 = vmatpush1.msra.mxu0 0.0
  %97 = vmatprep.subr.mxu0 0.0
  %98 = vmatpush1.msra.mxu0 0.0
  %99 = vmatprep.subr.mxu0 0.0
  %100 = vmatpush1.msra.mxu0 0.0
  %101 = vmatprep.subr.mxu0 0.0
  %102 = vmatpush1.msra.mxu0 0.0
  %103 = vmatprep.subr.mxu0 0.0
  %104 = vmatpush1.msra.mxu0 0.0
  %105 = vmatprep.subr.mxu0 0.0
  %106 = vmatpush1.msra.mxu0 0.0
  %107 = vmatprep.subr.mxu0 0.0
  %108 = vmatpush1.msra.mxu0 0.0
  %109 = vmatprep.subr.mxu0 0.0
  %110 = vmatpush1.msra.mxu0 0.0
  %111 = vmatprep.subr.mxu0 0.0
  %112 = vmatpush1.msra.mxu0 0.0
  %113 = vmatprep.subr.mxu0 0.0
  %114 = vmatpush1.msra.mxu0 0.0
  %115 = vmatprep.subr.mxu0 0.0
  %116 = vmatpush1.msra.mxu0 0.0
  %117 = vmatprep.subr.mxu0 0.0
  %118 = vmatpush1.msra.mxu0 0.0
  %119 = vmatprep.subr.mxu0 0.0
  %120 = vmatpush1.msra.mxu0 0.0
  %121 = vmatprep.subr.mxu0 0.0
  %122 = vmatpush1.msra.mxu0 0.0
  %123 = vmatprep.subr.mxu0 0.0
  %124 = vmatpush1.msra.mxu0 0.0
  %125 = vmatprep.subr.mxu0 0.0
  %126 = vmatpush1.msra.mxu0 0.0
  %127 = vmatprep.subr.mxu0 0.0
  %128 = vmatpush1.msra.mxu0 0.0
  %129 = vmatprep.subr.mxu0 0.0
  %130 = vmatpush1.msra.mxu0 0.0
  %131 = vmatprep.subr.mxu0 0.0
  %132 = vmatpush1.msra.mxu0 0.0
  %133 = vmatprep.subr.mxu0 0.0
  %134 = vmatpush1.msra.mxu0 0.0
  %135 = vmatprep.subr.mxu0 0.0
  %136 = vmatpush1.msra.mxu0 0.0
  %137 = vmatprep.subr.mxu0 0.0
  %138 = vmatpush1.msra.mxu0 0.0
  %139 = vmatprep.subr.mxu0 0.0
  %140 = vmatpush1.msra.mxu0 0.0
  %141 = vmatprep.subr.mxu0 0.0
  %142 = vmatpush1.msra.mxu0 0.0
  %143 = vmatprep.subr.mxu0 0.0
  %144 = vmatpush1.msra.mxu0 0.0
  %145 = vmatprep.subr.mxu0 0.0
  %146 = vmatpush1.msra.mxu0 0.0
  %147 = vmatprep.mubr.f32.mxu0 0.0
  %148 = vmatmul.mubr.f32.gmra.mrb[0].mxu0 %v60
  %v149 = vpop.f32.mrb[0].mxu0
  %v150 = vadd.f32 %v56, %v149
  %v151 = vpop.f32.mrb[0].mxu0
  %152 = vmatprep.mubr.f32.mxu0 0.0
  %153 = vmatmul.mubr.f32.gmra.mrb[0].mxu0 %v63
  %v154 = vpop.f32.mrb[0].mxu0
  %v155 = vadd.f32 %v56, %v154
  %v156 = vpop.f32.mrb[0].mxu0
  %157 = vmatprep.mubr.f32.mxu0 0.0
  %158 = vmatmul.mubr.f32.gmra.mrb[0].mxu0 %v66
  %v159 = vpop.f32.mrb[0].mxu0
  %v160 = vadd.f32 %v56, %v159
  %v161 = vpop.f32.mrb[0].mxu0
  %162 = vmatprep.mubr.f32.mxu0 0.0
  %163 = vmatmul.mubr.f32.gmra.mrb[0].mxu0 %v69
  %v164 = vpop.f32.mrb[0].mxu0
  %v165 = vadd.f32 %v56, %v164
  %v166 = vpop.f32.mrb[0].mxu0
  %167 = vmatprep.mubr.f32.mxu0 0.0
  %168 = vmatmul.mubr.f32.gmra.mrb[0].mxu0 %v72
  %v169 = vpop.f32.mrb[0].mxu0
  %v170 = vadd.f32 %v56, %v169
  %v171 = vpop.f32.mrb[0].mxu0
  %172 = vmatprep.mubr.f32.mxu0 0.0
  %173 = vmatmul.mubr.f32.gmra.mrb[0].mxu0 %v75
  %v174 = vpop.f32.mrb[0].mxu0
  %v175 = vadd.f32 %v56, %v174
  %v176 = vpop.f32.mrb[0].mxu0
  %177 = vmatprep.mubr.f32.mxu0 0.0
  %178 = vmatmul.mubr.f32.gmra.mrb[0].mxu0 %v78
  %v179 = vpop.f32.mrb[0].mxu0
  %v180 = vadd.f32 %v56, %v179
  %v181 = vpop.f32.mrb[0].mxu0
  %182 = vmatprep.mubr.f32.mxu0 0.0
  %183 = vmatmul.mubr.f32.gmra.mrb[0].mxu0 %v81
  %v184 = vpop.f32.mrb[0].mxu0
  %v185 = vadd.f32 %v56, %v184
  %v186 = vpop.f32.mrb[0].mxu0
  %187 = vdwg.mxu0
  %188 = vst [vmem:[#allocation3] sm:$0xff] %v150
  %189 = vst [vmem:[#allocation3 + $0x8] sm:$0xff] %v155
  %190 = vst [vmem:[#allocation3 + $0x10] sm:$0xff] %v160
  %191 = vst [vmem:[#allocation3 + $0x18] sm:$0xff] %v165
  %192 = vst [vmem:[#allocation3 + $0x20] sm:$0xff] %v170
  %193 = vst [vmem:[#allocation3 + $0x28] sm:$0xff] %v175
  %194 = vst [vmem:[#allocation3 + $0x30] sm:$0xff] %v180
  %195 = vst [vmem:[#allocation3 + $0x38] sm:$0xff] %v185
  %v196 = vld [vmem:[#allocation3] sm:$0xff]
  %vm197 = vcmask 261120
  %v199 = vsel %vm197, 0.0, 0
  %201 = vmatprep.subr.mxu0 0.0
  %202 = vmatpush1.msra.mxu0 %v39
  %203 = vmatprep.subr.mxu0 0.0
  %204 = vmatpush1.msra.mxu0 %v40
  %205 = vmatprep.subr.mxu0 0.0
  %206 = vmatpush1.msra.mxu0 %v41
  %207 = vmatprep.subr.mxu0 0.0
  %208 = vmatpush1.msra.mxu0 %v42
  %209 = vmatprep.subr.mxu0 0.0
  %210 = vmatpush1.msra.mxu0 0.0
  %211 = vmatprep.subr.mxu0 0.0
  %212 = vmatpush1.msra.mxu0 0.0
  %213 = vmatprep.subr.mxu0 0.0
  %214 = vmatpush1.msra.mxu0 0.0
  %215 = vmatprep.subr.mxu0 0.0
  %216 = vmatpush1.msra.mxu0 0.0
  %217 = vmatprep.subr.mxu0 0.0
  %218 = vmatpush1.msra.mxu0 0.0
  %219 = vmatprep.subr.mxu0 0.0
  %220 = vmatpush1.msra.mxu0 0.0
  %221 = vmatprep.subr.mxu0 0.0
  %222 = vmatpush1.msra.mxu0 0.0
  %223 = vmatprep.subr.mxu0 0.0
  %224 = vmatpush1.msra.mxu0 0.0
  %225 = vmatprep.subr.mxu0 0.0
  %226 = vmatpush1.msra.mxu0 0.0
  %227 = vmatprep.subr.mxu0 0.0
  %228 = vmatpush1.msra.mxu0 0.0
  %229 = vmatprep.subr.mxu0 0.0
  %230 = vmatpush1.msra.mxu0 0.0
  %231 = vmatprep.subr.mxu0 0.0
  %232 = vmatpush1.msra.mxu0 0.0
  %233 = vmatprep.subr.mxu0 0.0
  %234 = vmatpush1.msra.mxu0 0.0
  %235 = vmatprep.subr.mxu0 0.0
  %236 = vmatpush1.msra.mxu0 0.0
  %237 = vmatprep.subr.mxu0 0.0
  %238 = vmatpush1.msra.mxu0 0.0
  %239 = vmatprep.subr.mxu0 0.0
  %240 = vmatpush1.msra.mxu0 0.0
  %241 = vmatprep.subr.mxu0 0.0
  %242 = vmatpush1.msra.mxu0 0.0
  %243 = vmatprep.subr.mxu0 0.0
  %244 = vmatpush1.msra.mxu0 0.0
  %245 = vmatprep.subr.mxu0 0.0
  %246 = vmatpush1.msra.mxu0 0.0
  %247 = vmatprep.subr.mxu0 0.0
  %248 = vmatpush1.msra.mxu0 0.0
  %249 = vmatprep.subr.mxu0 0.0
  %250 = vmatpush1.msra.mxu0 0.0
  %251 = vmatprep.subr.mxu0 0.0
  %252 = vmatpush1.msra.mxu0 0.0
  %253 = vmatprep.subr.mxu0 0.0
  %254 = vmatpush1.msra.mxu0 0.0
  %255 = vmatprep.subr.mxu0 0.0
  %256 = vmatpush1.msra.mxu0 0.0
  %257 = vmatprep.subr.mxu0 0.0
  %258 = vmatpush1.msra.mxu0 0.0
  %259 = vmatprep.subr.mxu0 0.0
  %260 = vmatpush1.msra.mxu0 0.0
  %261 = vmatprep.subr.mxu0 0.0
  %262 = vmatpush1.msra.mxu0 0.0
  %263 = vmatprep.subr.mxu0 0.0
  %264 = vmatpush1.msra.mxu0 0.0
  %265 = vmatprep.mubr.f32.mxu0 0.0
  %266 = vmatmul.mubr.f32.gmra.mrb[0].mxu0 %v199
  %v267 = vpop.f32.mrb[0].mxu0
  %v268 = vadd.f32 0.0, %v267
  %v269 = vpop.f32.mrb[0].mxu0
  %270 = vdwg.mxu0
  %v271 = vadd.f32 %v196, %v268
  %v272 = vtanh.pop %v271
  %v273 = vxor.u32 %v271, 2147483648
  %v274 = vmul.f32 %v273, 1.442695
  %v275 = vpow.pop %v274
  %v276 = vadd.f32 %v275, 1.0
  %v277 = vrcp.pop %v276
  %v278 = vmul.f32 1.0, %v277
  %v279 = vsel %vm36, %v272, %v278
  %v280 = vmul.f32 %v279, 0.0
  %282 = vrot.lane.b32.xlu0 %v279, 64
  %v283 = vpop.permute.xlu0 %282
  %v285 = vmul.f32 %v279, %v283
  %287 = vrot.lane.b32.xlu0 %v285, 32
  %v288 = vpop.permute.xlu0 %287
  %v290 = vadd.f32 %v280, %v288
  %v291 = vtanh.pop %v290
  %293 = vrot.lane.b32.xlu0 %v291, 64
  %v294 = vpop.permute.xlu0 %293
  %v296 = vmul.f32 %v279, %v294
  %298 = vrot.lane.b32.xlu0 %v296, 32
  %v299 = vpop.permute.xlu0 %298
  %301 = vst.msk [vmem:[#allocation2] sm:$0xff] %vm197, %v299
  %s302 = scalar_lea.vmem [#allocation3], 8
  %v303 = vld [vmem:[%s302] sm:$0xff]
  %v304 = vsel %vm197, %v299, 0
  %306 = vmatprep.subr.mxu0 0.0
  %307 = vmatpush1.msra.mxu0 %v39
  %308 = vmatprep.subr.mxu0 0.0
  %309 = vmatpush1.msra.mxu0 %v40
  %310 = vmatprep.subr.mxu0 0.0
  %311 = vmatpush1.msra.mxu0 %v41
  %312 = vmatprep.subr.mxu0 0.0
  %313 = vmatpush1.msra.mxu0 %v42
  %314 = vmatprep.subr.mxu0 0.0
  %315 = vmatpush1.msra.mxu0 0.0
  %316 = vmatprep.subr.mxu0 0.0
  %317 = vmatpush1.msra.mxu0 0.0
  %318 = vmatprep.subr.mxu0 0.0
  %319 = vmatpush1.msra.mxu0 0.0
  %320 = vmatprep.subr.mxu0 0.0
  %321 = vmatpush1.msra.mxu0 0.0
  %322 = vmatprep.subr.mxu0 0.0
  %323 = vmatpush1.msra.mxu0 0.0
  %324 = vmatprep.subr.mxu0 0.0
  %325 = vmatpush1.msra.mxu0 0.0
  %326 = vmatprep.subr.mxu0 0.0
  %327 = vmatpush1.msra.mxu0 0.0
  %328 = vmatprep.subr.mxu0 0.0
  %329 = vmatpush1.msra.mxu0 0.0
  %330 = vmatprep.subr.mxu0 0.0
  %331 = vmatpush1.msra.mxu0 0.0
  %332 = vmatprep.subr.mxu0 0.0
  %333 = vmatpush1.msra.mxu0 0.0
  %334 = vmatprep.subr.mxu0 0.0
  %335 = vmatpush1.msra.mxu0 0.0
  %336 = vmatprep.subr.mxu0 0.0
  %337 = vmatpush1.msra.mxu0 0.0
  %338 = vmatprep.subr.mxu0 0.0
  %339 = vmatpush1.msra.mxu0 0.0
  %340 = vmatprep.subr.mxu0 0.0
  %341 = vmatpush1.msra.mxu0 0.0
  %342 = vmatprep.subr.mxu0 0.0
  %343 = vmatpush1.msra.mxu0 0.0
  %344 = vmatprep.subr.mxu0 0.0
  %345 = vmatpush1.msra.mxu0 0.0
  %346 = vmatprep.subr.mxu0 0.0
  %347 = vmatpush1.msra.mxu0 0.0
  %348 = vmatprep.subr.mxu0 0.0
  %349 = vmatpush1.msra.mxu0 0.0
  %350 = vmatprep.subr.mxu0 0.0
  %351 = vmatpush1.msra.mxu0 0.0
  %352 = vmatprep.subr.mxu0 0.0
  %353 = vmatpush1.msra.mxu0 0.0
  %354 = vmatprep.subr.mxu0 0.0
  %355 = vmatpush1.msra.mxu0 0.0
  %356 = vmatprep.subr.mxu0 0.0
  %357 = vmatpush1.msra.mxu0 0.0
  %358 = vmatprep.subr.mxu0 0.0
  %359 = vmatpush1.msra.mxu0 0.0
  %360 = vmatprep.subr.mxu0 0.0
  %361 = vmatpush1.msra.mxu0 0.0
  %362 = vmatprep.subr.mxu0 0.0
  %363 = vmatpush1.msra.mxu0 0.0
  %364 = vmatprep.subr.mxu0 0.0
  %365 = vmatpush1.msra.mxu0 0.0
  %366 = vmatprep.subr.mxu0 0.0
  %367 = vmatpush1.msra.mxu0 0.0
  %368 = vmatprep.subr.mxu0 0.0
  %369 = vmatpush1.msra.mxu0 0.0
  %370 = vmatprep.mubr.f32.mxu0 0.0
  %371 = vmatmul.mubr.f32.gmra.mrb[0].mxu0 %v304
  %v372 = vpop.f32.mrb[0].mxu0
  %v373 = vadd.f32 0.0, %v372
  %v374 = vpop.f32.mrb[0].mxu0
  %375 = vdwg.mxu0
  %v376 = vadd.f32 %v303, %v373
  %v377 = vtanh.pop %v376
  %v378 = vxor.u32 %v376, 2147483648
  %v379 = vmul.f32 %v378, 1.442695
  %v380 = vpow.pop %v379
  %v381 = vadd.f32 %v380, 1.0
  %v382 = vrcp.pop %v381
  %v383 = vmul.f32 1.0, %v382
  %v384 = vsel %vm36, %v377, %v383
  %v385 = vmul.f32 %v384, %v290
  %387 = vrot.lane.b32.xlu0 %v384, 64
  %v388 = vpop.permute.xlu0 %387
  %v390 = vmul.f32 %v384, %v388
  %392 = vrot.lane.b32.xlu0 %v390, 32
  %v393 = vpop.permute.xlu0 %392
  %v395 = vadd.f32 %v385, %v393
  %v396 = vtanh.pop %v395
  %398 = vrot.lane.b32.xlu0 %v396, 64
  %v399 = vpop.permute.xlu0 %398
  %v401 = vmul.f32 %v384, %v399
  %403 = vrot.lane.b32.xlu0 %v401, 32
  %v404 = vpop.permute.xlu0 %403
  %s406 = scalar_lea.vmem [#allocation2], 8
  %407 = vst.msk [vmem:[%s406] sm:$0xff] %vm197, %v404
  %s408 = scalar_lea.vmem [#allocation3], 16
  %v409 = vld [vmem:[%s408] sm:$0xff]
  %v410 = vsel %vm197, %v404, 0
  %412 = vmatprep.subr.mxu0 0.0
  %413 = vmatpush1.msra.mxu0 %v39
  %414 = vmatprep.subr.mxu0 0.0
  %415 = vmatpush1.msra.mxu0 %v40
  %416 = vmatprep.subr.mxu0 0.0
  %417 = vmatpush1.msra.mxu0 %v41
  %418 = vmatprep.subr.mxu0 0.0
  %419 = vmatpush1.msra.mxu0 %v42
  %420 = vmatprep.subr.mxu0 0.0
  %421 = vmatpush1.msra.mxu0 0.0
  %422 = vmatprep.subr.mxu0 0.0
  %423 = vmatpush1.msra.mxu0 0.0
  %424 = vmatprep.subr.mxu0 0.0
  %425 = vmatpush1.msra.mxu0 0.0
  %426 = vmatprep.subr.mxu0 0.0
  %427 = vmatpush1.msra.mxu0 0.0
  %428 = vmatprep.subr.mxu0 0.0
  %429 = vmatpush1.msra.mxu0 0.0
  %430 = vmatprep.subr.mxu0 0.0
  %431 = vmatpush1.msra.mxu0 0.0
  %432 = vmatprep.subr.mxu0 0.0
  %433 = vmatpush1.msra.mxu0 0.0
  %434 = vmatprep.subr.mxu0 0.0
  %435 = vmatpush1.msra.mxu0 0.0
  %436 = vmatprep.subr.mxu0 0.0
  %437 = vmatpush1.msra.mxu0 0.0
  %438 = vmatprep.subr.mxu0 0.0
  %439 = vmatpush1.msra.mxu0 0.0
  %440 = vmatprep.subr.mxu0 0.0
  %441 = vmatpush1.msra.mxu0 0.0
  %442 = vmatprep.subr.mxu0 0.0
  %443 = vmatpush1.msra.mxu0 0.0
  %444 = vmatprep.subr.mxu0 0.0
  %445 = vmatpush1.msra.mxu0 0.0
  %446 = vmatprep.subr.mxu0 0.0
  %447 = vmatpush1.msra.mxu0 0.0
  %448 = vmatprep.subr.mxu0 0.0
  %449 = vmatpush1.msra.mxu0 0.0
  %450 = vmatprep.subr.mxu0 0.0
  %451 = vmatpush1.msra.mxu0 0.0
  %452 = vmatprep.subr.mxu0 0.0
  %453 = vmatpush1.msra.mxu0 0.0
  %454 = vmatprep.subr.mxu0 0.0
  %455 = vmatpush1.msra.mxu0 0.0
  %456 = vmatprep.subr.mxu0 0.0
  %457 = vmatpush1.msra.mxu0 0.0
  %458 = vmatprep.subr.mxu0 0.0
  %459 = vmatpush1.msra.mxu0 0.0
  %460 = vmatprep.subr.mxu0 0.0
  %461 = vmatpush1.msra.mxu0 0.0
  %462 = vmatprep.subr.mxu0 0.0
  %463 = vmatpush1.msra.mxu0 0.0
  %464 = vmatprep.subr.mxu0 0.0
  %465 = vmatpush1.msra.mxu0 0.0
  %466 = vmatprep.subr.mxu0 0.0
  %467 = vmatpush1.msra.mxu0 0.0
  %468 = vmatprep.subr.mxu0 0.0
  %469 = vmatpush1.msra.mxu0 0.0
  %470 = vmatprep.subr.mxu0 0.0
  %471 = vmatpush1.msra.mxu0 0.0
  %472 = vmatprep.subr.mxu0 0.0
  %473 = vmatpush1.msra.mxu0 0.0
  %474 = vmatprep.subr.mxu0 0.0
  %475 = vmatpush1.msra.mxu0 0.0
  %476 = vmatprep.mubr.f32.mxu0 0.0
  %477 = vmatmul.mubr.f32.gmra.mrb[0].mxu0 %v410
  %v478 = vpop.f32.mrb[0].mxu0
  %v479 = vadd.f32 0.0, %v478
  %v480 = vpop.f32.mrb[0].mxu0
  %481 = vdwg.mxu0
  %v482 = vadd.f32 %v409, %v479
  %v483 = vtanh.pop %v482
  %v484 = vxor.u32 %v482, 2147483648
  %v485 = vmul.f32 %v484, 1.442695
  %v486 = vpow.pop %v485
  %v487 = vadd.f32 %v486, 1.0
  %v488 = vrcp.pop %v487
  %v489 = vmul.f32 1.0, %v488
  %v490 = vsel %vm36, %v483, %v489
  %v491 = vmul.f32 %v490, %v395
  %493 = vrot.lane.b32.xlu0 %v490, 64
  %v494 = vpop.permute.xlu0 %493
  %v496 = vmul.f32 %v490, %v494
  %498 = vrot.lane.b32.xlu0 %v496, 32
  %v499 = vpop.permute.xlu0 %498
  %v501 = vadd.f32 %v491, %v499
  %v502 = vtanh.pop %v501
  %504 = vrot.lane.b32.xlu0 %v502, 64
  %v505 = vpop.permute.xlu0 %504
  %v507 = vmul.f32 %v490, %v505
  %509 = vrot.lane.b32.xlu0 %v507, 32
  %v510 = vpop.permute.xlu0 %509
  %s512 = scalar_lea.vmem [#allocation2], 16
  %513 = vst.msk [vmem:[%s512] sm:$0xff] %vm197, %v510
  %s514 = scalar_lea.vmem [#allocation3], 24
  %v515 = vld [vmem:[%s514] sm:$0xff]
  %v516 = vsel %vm197, %v510, 0
  %518 = vmatprep.subr.mxu0 0.0
  %519 = vmatpush1.msra.mxu0 %v39
  %520 = vmatprep.subr.mxu0 0.0
  %521 = vmatpush1.msra.mxu0 %v40
  %522 = vmatprep.subr.mxu0 0.0
  %523 = vmatpush1.msra.mxu0 %v41
  %524 = vmatprep.subr.mxu0 0.0
  %525 = vmatpush1.msra.mxu0 %v42
  %526 = vmatprep.subr.mxu0 0.0
  %527 = vmatpush1.msra.mxu0 0.0
  %528 = vmatprep.subr.mxu0 0.0
  %529 = vmatpush1.msra.mxu0 0.0
  %530 = vmatprep.subr.mxu0 0.0
  %531 = vmatpush1.msra.mxu0 0.0
  %532 = vmatprep.subr.mxu0 0.0
  %533 = vmatpush1.msra.mxu0 0.0
  %534 = vmatprep.subr.mxu0 0.0
  %535 = vmatpush1.msra.mxu0 0.0
  %536 = vmatprep.subr.mxu0 0.0
  %537 = vmatpush1.msra.mxu0 0.0
  %538 = vmatprep.subr.mxu0 0.0
  %539 = vmatpush1.msra.mxu0 0.0
  %540 = vmatprep.subr.mxu0 0.0
  %541 = vmatpush1.msra.mxu0 0.0
  %542 = vmatprep.subr.mxu0 0.0
  %543 = vmatpush1.msra.mxu0 0.0
  %544 = vmatprep.subr.mxu0 0.0
  %545 = vmatpush1.msra.mxu0 0.0
  %546 = vmatprep.subr.mxu0 0.0
  %547 = vmatpush1.msra.mxu0 0.0
  %548 = vmatprep.subr.mxu0 0.0
  %549 = vmatpush1.msra.mxu0 0.0
  %550 = vmatprep.subr.mxu0 0.0
  %551 = vmatpush1.msra.mxu0 0.0
  %552 = vmatprep.subr.mxu0 0.0
  %553 = vmatpush1.msra.mxu0 0.0
  %554 = vmatprep.subr.mxu0 0.0
  %555 = vmatpush1.msra.mxu0 0.0
  %556 = vmatprep.subr.mxu0 0.0
  %557 = vmatpush1.msra.mxu0 0.0
  %558 = vmatprep.subr.mxu0 0.0
  %559 = vmatpush1.msra.mxu0 0.0
  %560 = vmatprep.subr.mxu0 0.0
  %561 = vmatpush1.msra.mxu0 0.0
  %562 = vmatprep.subr.mxu0 0.0
  %563 = vmatpush1.msra.mxu0 0.0
  %564 = vmatprep.subr.mxu0 0.0
  %565 = vmatpush1.msra.mxu0 0.0
  %566 = vmatprep.subr.mxu0 0.0
  %567 = vmatpush1.msra.mxu0 0.0
  %568 = vmatprep.subr.mxu0 0.0
  %569 = vmatpush1.msra.mxu0 0.0
  %570 = vmatprep.subr.mxu0 0.0
  %571 = vmatpush1.msra.mxu0 0.0
  %572 = vmatprep.subr.mxu0 0.0
  %573 = vmatpush1.msra.mxu0 0.0
  %574 = vmatprep.subr.mxu0 0.0
  %575 = vmatpush1.msra.mxu0 0.0
  %576 = vmatprep.subr.mxu0 0.0
  %577 = vmatpush1.msra.mxu0 0.0
  %578 = vmatprep.subr.mxu0 0.0
  %579 = vmatpush1.msra.mxu0 0.0
  %580 = vmatprep.subr.mxu0 0.0
  %581 = vmatpush1.msra.mxu0 0.0
  %582 = vmatprep.mubr.f32.mxu0 0.0
  %583 = vmatmul.mubr.f32.gmra.mrb[0].mxu0 %v516
  %v584 = vpop.f32.mrb[0].mxu0
  %v585 = vadd.f32 0.0, %v584
  %v586 = vpop.f32.mrb[0].mxu0
  %587 = vdwg.mxu0
  %v588 = vadd.f32 %v515, %v585
  %v589 = vtanh.pop %v588
  %v590 = vxor.u32 %v588, 2147483648
  %v591 = vmul.f32 %v590, 1.442695
  %v592 = vpow.pop %v591
  %v593 = vadd.f32 %v592, 1.0
  %v594 = vrcp.pop %v593
  %v595 = vmul.f32 1.0, %v594
  %v596 = vsel %vm36, %v589, %v595
  %v597 = vmul.f32 %v596, %v501
  %599 = vrot.lane.b32.xlu0 %v596, 64
  %v600 = vpop.permute.xlu0 %599
  %v602 = vmul.f32 %v596, %v600
  %604 = vrot.lane.b32.xlu0 %v602, 32
  %v605 = vpop.permute.xlu0 %604
  %v607 = vadd.f32 %v597, %v605
  %v608 = vtanh.pop %v607
  %610 = vrot.lane.b32.xlu0 %v608, 64
  %v611 = vpop.permute.xlu0 %610
  %v613 = vmul.f32 %v596, %v611
  %615 = vrot.lane.b32.xlu0 %v613, 32
  %v616 = vpop.permute.xlu0 %615
  %s618 = scalar_lea.vmem [#allocation2], 24
  %619 = vst.msk [vmem:[%s618] sm:$0xff] %vm197, %v616
  %s620 = scalar_lea.vmem [#allocation3], 32
  %v621 = vld [vmem:[%s620] sm:$0xff]
  %v622 = vsel %vm197, %v616, 0
  %624 = vmatprep.subr.mxu0 0.0
  %625 = vmatpush1.msra.mxu0 %v39
  %626 = vmatprep.subr.mxu0 0.0
  %627 = vmatpush1.msra.mxu0 %v40
  %628 = vmatprep.subr.mxu0 0.0
  %629 = vmatpush1.msra.mxu0 %v41
  %630 = vmatprep.subr.mxu0 0.0
  %631 = vmatpush1.msra.mxu0 %v42
  %632 = vmatprep.subr.mxu0 0.0
  %633 = vmatpush1.msra.mxu0 0.0
  %634 = vmatprep.subr.mxu0 0.0
  %635 = vmatpush1.msra.mxu0 0.0
  %636 = vmatprep.subr.mxu0 0.0
  %637 = vmatpush1.msra.mxu0 0.0
  %638 = vmatprep.subr.mxu0 0.0
  %639 = vmatpush1.msra.mxu0 0.0
  %640 = vmatprep.subr.mxu0 0.0
  %641 = vmatpush1.msra.mxu0 0.0
  %642 = vmatprep.subr.mxu0 0.0
  %643 = vmatpush1.msra.mxu0 0.0
  %644 = vmatprep.subr.mxu0 0.0
  %645 = vmatpush1.msra.mxu0 0.0
  %646 = vmatprep.subr.mxu0 0.0
  %647 = vmatpush1.msra.mxu0 0.0
  %648 = vmatprep.subr.mxu0 0.0
  %649 = vmatpush1.msra.mxu0 0.0
  %650 = vmatprep.subr.mxu0 0.0
  %651 = vmatpush1.msra.mxu0 0.0
  %652 = vmatprep.subr.mxu0 0.0
  %653 = vmatpush1.msra.mxu0 0.0
  %654 = vmatprep.subr.mxu0 0.0
  %655 = vmatpush1.msra.mxu0 0.0
  %656 = vmatprep.subr.mxu0 0.0
  %657 = vmatpush1.msra.mxu0 0.0
  %658 = vmatprep.subr.mxu0 0.0
  %659 = vmatpush1.msra.mxu0 0.0
  %660 = vmatprep.subr.mxu0 0.0
  %661 = vmatpush1.msra.mxu0 0.0
  %662 = vmatprep.subr.mxu0 0.0
  %663 = vmatpush1.msra.mxu0 0.0
  %664 = vmatprep.subr.mxu0 0.0
  %665 = vmatpush1.msra.mxu0 0.0
  %666 = vmatprep.subr.mxu0 0.0
  %667 = vmatpush1.msra.mxu0 0.0
  %668 = vmatprep.subr.mxu0 0.0
  %669 = vmatpush1.msra.mxu0 0.0
  %670 = vmatprep.subr.mxu0 0.0
  %671 = vmatpush1.msra.mxu0 0.0
  %672 = vmatprep.subr.mxu0 0.0
  %673 = vmatpush1.msra.mxu0 0.0
  %674 = vmatprep.subr.mxu0 0.0
  %675 = vmatpush1.msra.mxu0 0.0
  %676 = vmatprep.subr.mxu0 0.0
  %677 = vmatpush1.msra.mxu0 0.0
  %678 = vmatprep.subr.mxu0 0.0
  %679 = vmatpush1.msra.mxu0 0.0
  %680 = vmatprep.subr.mxu0 0.0
  %681 = vmatpush1.msra.mxu0 0.0
  %682 = vmatprep.subr.mxu0 0.0
  %683 = vmatpush1.msra.mxu0 0.0
  %684 = vmatprep.subr.mxu0 0.0
  %685 = vmatpush1.msra.mxu0 0.0
  %686 = vmatprep.subr.mxu0 0.0
  %687 = vmatpush1.msra.mxu0 0.0
  %688 = vmatprep.mubr.f32.mxu0 0.0
  %689 = vmatmul.mubr.f32.gmra.mrb[0].mxu0 %v622
  %v690 = vpop.f32.mrb[0].mxu0
  %v691 = vadd.f32 0.0, %v690
  %v692 = vpop.f32.mrb[0].mxu0
  %693 = vdwg.mxu0
  %v694 = vadd.f32 %v621, %v691
  %v695 = vtanh.pop %v694
  %v696 = vxor.u32 %v694, 2147483648
  %v697 = vmul.f32 %v696, 1.442695
  %v698 = vpow.pop %v697
  %v699 = vadd.f32 %v698, 1.0
  %v700 = vrcp.pop %v699
  %v701 = vmul.f32 1.0, %v700
  %v702 = vsel %vm36, %v695, %v701
  %v703 = vmul.f32 %v702, %v607
  %705 = vrot.lane.b32.xlu0 %v702, 64
  %v706 = vpop.permute.xlu0 %705
  %v708 = vmul.f32 %v702, %v706
  %710 = vrot.lane.b32.xlu0 %v708, 32
  %v711 = vpop.permute.xlu0 %710
  %v713 = vadd.f32 %v703, %v711
  %v714 = vtanh.pop %v713
  %716 = vrot.lane.b32.xlu0 %v714, 64
  %v717 = vpop.permute.xlu0 %716
  %v719 = vmul.f32 %v702, %v717
  %721 = vrot.lane.b32.xlu0 %v719, 32
  %v722 = vpop.permute.xlu0 %721
  %s724 = scalar_lea.vmem [#allocation2], 32
  %725 = vst.msk [vmem:[%s724] sm:$0xff] %vm197, %v722
  %s726 = scalar_lea.vmem [#allocation3], 40
  %v727 = vld [vmem:[%s726] sm:$0xff]
  %v728 = vsel %vm197, %v722, 0
  %730 = vmatprep.subr.mxu0 0.0
  %731 = vmatpush1.msra.mxu0 %v39
  %732 = vmatprep.subr.mxu0 0.0
  %733 = vmatpush1.msra.mxu0 %v40
  %734 = vmatprep.subr.mxu0 0.0
  %735 = vmatpush1.msra.mxu0 %v41
  %736 = vmatprep.subr.mxu0 0.0
  %737 = vmatpush1.msra.mxu0 %v42
  %738 = vmatprep.subr.mxu0 0.0
  %739 = vmatpush1.msra.mxu0 0.0
  %740 = vmatprep.subr.mxu0 0.0
  %741 = vmatpush1.msra.mxu0 0.0
  %742 = vmatprep.subr.mxu0 0.0
  %743 = vmatpush1.msra.mxu0 0.0
  %744 = vmatprep.subr.mxu0 0.0
  %745 = vmatpush1.msra.mxu0 0.0
  %746 = vmatprep.subr.mxu0 0.0
  %747 = vmatpush1.msra.mxu0 0.0
  %748 = vmatprep.subr.mxu0 0.0
  %749 = vmatpush1.msra.mxu0 0.0
  %750 = vmatprep.subr.mxu0 0.0
  %751 = vmatpush1.msra.mxu0 0.0
  %752 = vmatprep.subr.mxu0 0.0
  %753 = vmatpush1.msra.mxu0 0.0
  %754 = vmatprep.subr.mxu0 0.0
  %755 = vmatpush1.msra.mxu0 0.0
  %756 = vmatprep.subr.mxu0 0.0
  %757 = vmatpush1.msra.mxu0 0.0
  %758 = vmatprep.subr.mxu0 0.0
  %759 = vmatpush1.msra.mxu0 0.0
  %760 = vmatprep.subr.mxu0 0.0
  %761 = vmatpush1.msra.mxu0 0.0
  %762 = vmatprep.subr.mxu0 0.0
  %763 = vmatpush1.msra.mxu0 0.0
  %764 = vmatprep.subr.mxu0 0.0
  %765 = vmatpush1.msra.mxu0 0.0
  %766 = vmatprep.subr.mxu0 0.0
  %767 = vmatpush1.msra.mxu0 0.0
  %768 = vmatprep.subr.mxu0 0.0
  %769 = vmatpush1.msra.mxu0 0.0
  %770 = vmatprep.subr.mxu0 0.0
  %771 = vmatpush1.msra.mxu0 0.0
  %772 = vmatprep.subr.mxu0 0.0
  %773 = vmatpush1.msra.mxu0 0.0
  %774 = vmatprep.subr.mxu0 0.0
  %775 = vmatpush1.msra.mxu0 0.0
  %776 = vmatprep.subr.mxu0 0.0
  %777 = vmatpush1.msra.mxu0 0.0
  %778 = vmatprep.subr.mxu0 0.0
  %779 = vmatpush1.msra.mxu0 0.0
  %780 = vmatprep.subr.mxu0 0.0
  %781 = vmatpush1.msra.mxu0 0.0
  %782 = vmatprep.subr.mxu0 0.0
  %783 = vmatpush1.msra.mxu0 0.0
  %784 = vmatprep.subr.mxu0 0.0
  %785 = vmatpush1.msra.mxu0 0.0
  %786 = vmatprep.subr.mxu0 0.0
  %787 = vmatpush1.msra.mxu0 0.0
  %788 = vmatprep.subr.mxu0 0.0
  %789 = vmatpush1.msra.mxu0 0.0
  %790 = vmatprep.subr.mxu0 0.0
  %791 = vmatpush1.msra.mxu0 0.0
  %792 = vmatprep.subr.mxu0 0.0
  %793 = vmatpush1.msra.mxu0 0.0
  %794 = vmatprep.mubr.f32.mxu0 0.0
  %795 = vmatmul.mubr.f32.gmra.mrb[0].mxu0 %v728
  %v796 = vpop.f32.mrb[0].mxu0
  %v797 = vadd.f32 0.0, %v796
  %v798 = vpop.f32.mrb[0].mxu0
  %799 = vdwg.mxu0
  %v800 = vadd.f32 %v727, %v797
  %v801 = vtanh.pop %v800
  %v802 = vxor.u32 %v800, 2147483648
  %v803 = vmul.f32 %v802, 1.442695
  %v804 = vpow.pop %v803
  %v805 = vadd.f32 %v804, 1.0
  %v806 = vrcp.pop %v805
  %v807 = vmul.f32 1.0, %v806
  %v808 = vsel %vm36, %v801, %v807
  %v809 = vmul.f32 %v808, %v713
  %811 = vrot.lane.b32.xlu0 %v808, 64
  %v812 = vpop.permute.xlu0 %811
  %v814 = vmul.f32 %v808, %v812
  %816 = vrot.lane.b32.xlu0 %v814, 32
  %v817 = vpop.permute.xlu0 %816
  %v819 = vadd.f32 %v809, %v817
  %v820 = vtanh.pop %v819
  %822 = vrot.lane.b32.xlu0 %v820, 64
  %v823 = vpop.permute.xlu0 %822
  %v825 = vmul.f32 %v808, %v823
  %827 = vrot.lane.b32.xlu0 %v825, 32
  %v828 = vpop.permute.xlu0 %827
  %s830 = scalar_lea.vmem [#allocation2], 40
  %831 = vst.msk [vmem:[%s830] sm:$0xff] %vm197, %v828
  %s832 = scalar_lea.vmem [#allocation3], 48
  %v833 = vld [vmem:[%s832] sm:$0xff]
  %v834 = vsel %vm197, %v828, 0
  %836 = vmatprep.subr.mxu0 0.0
  %837 = vmatpush1.msra.mxu0 %v39
  %838 = vmatprep.subr.mxu0 0.0
  %839 = vmatpush1.msra.mxu0 %v40
  %840 = vmatprep.subr.mxu0 0.0
  %841 = vmatpush1.msra.mxu0 %v41
  %842 = vmatprep.subr.mxu0 0.0
  %843 = vmatpush1.msra.mxu0 %v42
  %844 = vmatprep.subr.mxu0 0.0
  %845 = vmatpush1.msra.mxu0 0.0
  %846 = vmatprep.subr.mxu0 0.0
  %847 = vmatpush1.msra.mxu0 0.0
  %848 = vmatprep.subr.mxu0 0.0
  %849 = vmatpush1.msra.mxu0 0.0
  %850 = vmatprep.subr.mxu0 0.0
  %851 = vmatpush1.msra.mxu0 0.0
  %852 = vmatprep.subr.mxu0 0.0
  %853 = vmatpush1.msra.mxu0 0.0
  %854 = vmatprep.subr.mxu0 0.0
  %855 = vmatpush1.msra.mxu0 0.0
  %856 = vmatprep.subr.mxu0 0.0
  %857 = vmatpush1.msra.mxu0 0.0
  %858 = vmatprep.subr.mxu0 0.0
  %859 = vmatpush1.msra.mxu0 0.0
  %860 = vmatprep.subr.mxu0 0.0
  %861 = vmatpush1.msra.mxu0 0.0
  %862 = vmatprep.subr.mxu0 0.0
  %863 = vmatpush1.msra.mxu0 0.0
  %864 = vmatprep.subr.mxu0 0.0
  %865 = vmatpush1.msra.mxu0 0.0
  %866 = vmatprep.subr.mxu0 0.0
  %867 = vmatpush1.msra.mxu0 0.0
  %868 = vmatprep.subr.mxu0 0.0
  %869 = vmatpush1.msra.mxu0 0.0
  %870 = vmatprep.subr.mxu0 0.0
  %871 = vmatpush1.msra.mxu0 0.0
  %872 = vmatprep.subr.mxu0 0.0
  %873 = vmatpush1.msra.mxu0 0.0
  %874 = vmatprep.subr.mxu0 0.0
  %875 = vmatpush1.msra.mxu0 0.0
  %876 = vmatprep.subr.mxu0 0.0
  %877 = vmatpush1.msra.mxu0 0.0
  %878 = vmatprep.subr.mxu0 0.0
  %879 = vmatpush1.msra.mxu0 0.0
  %880 = vmatprep.subr.mxu0 0.0
  %881 = vmatpush1.msra.mxu0 0.0
  %882 = vmatprep.subr.mxu0 0.0
  %883 = vmatpush1.msra.mxu0 0.0
  %884 = vmatprep.subr.mxu0 0.0
  %885 = vmatpush1.msra.mxu0 0.0
  %886 = vmatprep.subr.mxu0 0.0
  %887 = vmatpush1.msra.mxu0 0.0
  %888 = vmatprep.subr.mxu0 0.0
  %889 = vmatpush1.msra.mxu0 0.0
  %890 = vmatprep.subr.mxu0 0.0
  %891 = vmatpush1.msra.mxu0 0.0
  %892 = vmatprep.subr.mxu0 0.0
  %893 = vmatpush1.msra.mxu0 0.0
  %894 = vmatprep.subr.mxu0 0.0
  %895 = vmatpush1.msra.mxu0 0.0
  %896 = vmatprep.subr.mxu0 0.0
  %897 = vmatpush1.msra.mxu0 0.0
  %898 = vmatprep.subr.mxu0 0.0
  %899 = vmatpush1.msra.mxu0 0.0
  %900 = vmatprep.mubr.f32.mxu0 0.0
  %901 = vmatmul.mubr.f32.gmra.mrb[0].mxu0 %v834
  %v902 = vpop.f32.mrb[0].mxu0
  %v903 = vadd.f32 0.0, %v902
  %v904 = vpop.f32.mrb[0].mxu0
  %905 = vdwg.mxu0
  %v906 = vadd.f32 %v833, %v903
  %v907 = vtanh.pop %v906
  %v908 = vxor.u32 %v906, 2147483648
  %v909 = vmul.f32 %v908, 1.442695
  %v910 = vpow.pop %v909
  %v911 = vadd.f32 %v910, 1.0
  %v912 = vrcp.pop %v911
  %v913 = vmul.f32 1.0, %v912
  %v914 = vsel %vm36, %v907, %v913
  %v915 = vmul.f32 %v914, %v819
  %917 = vrot.lane.b32.xlu0 %v914, 64
  %v918 = vpop.permute.xlu0 %917
  %v920 = vmul.f32 %v914, %v918
  %922 = vrot.lane.b32.xlu0 %v920, 32
  %v923 = vpop.permute.xlu0 %922
  %v925 = vadd.f32 %v915, %v923
  %v926 = vtanh.pop %v925
  %928 = vrot.lane.b32.xlu0 %v926, 64
  %v929 = vpop.permute.xlu0 %928
  %v931 = vmul.f32 %v914, %v929
  %933 = vrot.lane.b32.xlu0 %v931, 32
  %v934 = vpop.permute.xlu0 %933
  %s936 = scalar_lea.vmem [#allocation2], 48
  %937 = vst.msk [vmem:[%s936] sm:$0xff] %vm197, %v934
  %s938 = scalar_lea.vmem [#allocation3], 56
  %v939 = vld [vmem:[%s938] sm:$0xff]
  %v940 = vsel %vm197, %v934, 0
  %942 = vmatprep.subr.mxu0 0.0
  %943 = vmatpush1.msra.mxu0 %v39
  %944 = vmatprep.subr.mxu0 0.0
  %945 = vmatpush1.msra.mxu0 %v40
  %946 = vmatprep.subr.mxu0 0.0
  %947 = vmatpush1.msra.mxu0 %v41
  %948 = vmatprep.subr.mxu0 0.0
  %949 = vmatpush1.msra.mxu0 %v42
  %950 = vmatprep.subr.mxu0 0.0
  %951 = vmatpush1.msra.mxu0 0.0
  %952 = vmatprep.subr.mxu0 0.0
  %953 = vmatpush1.msra.mxu0 0.0
  %954 = vmatprep.subr.mxu0 0.0
  %955 = vmatpush1.msra.mxu0 0.0
  %956 = vmatprep.subr.mxu0 0.0
  %957 = vmatpush1.msra.mxu0 0.0
  %958 = vmatprep.subr.mxu0 0.0
  %959 = vmatpush1.msra.mxu0 0.0
  %960 = vmatprep.subr.mxu0 0.0
  %961 = vmatpush1.msra.mxu0 0.0
  %962 = vmatprep.subr.mxu0 0.0
  %963 = vmatpush1.msra.mxu0 0.0
  %964 = vmatprep.subr.mxu0 0.0
  %965 = vmatpush1.msra.mxu0 0.0
  %966 = vmatprep.subr.mxu0 0.0
  %967 = vmatpush1.msra.mxu0 0.0
  %968 = vmatprep.subr.mxu0 0.0
  %969 = vmatpush1.msra.mxu0 0.0
  %970 = vmatprep.subr.mxu0 0.0
  %971 = vmatpush1.msra.mxu0 0.0
  %972 = vmatprep.subr.mxu0 0.0
  %973 = vmatpush1.msra.mxu0 0.0
  %974 = vmatprep.subr.mxu0 0.0
  %975 = vmatpush1.msra.mxu0 0.0
  %976 = vmatprep.subr.mxu0 0.0
  %977 = vmatpush1.msra.mxu0 0.0
  %978 = vmatprep.subr.mxu0 0.0
  %979 = vmatpush1.msra.mxu0 0.0
  %980 = vmatprep.subr.mxu0 0.0
  %981 = vmatpush1.msra.mxu0 0.0
  %982 = vmatprep.subr.mxu0 0.0
  %983 = vmatpush1.msra.mxu0 0.0
  %984 = vmatprep.subr.mxu0 0.0
  %985 = vmatpush1.msra.mxu0 0.0
  %986 = vmatprep.subr.mxu0 0.0
  %987 = vmatpush1.msra.mxu0 0.0
  %988 = vmatprep.subr.mxu0 0.0
  %989 = vmatpush1.msra.mxu0 0.0
  %990 = vmatprep.subr.mxu0 0.0
  %991 = vmatpush1.msra.mxu0 0.0
  %992 = vmatprep.subr.mxu0 0.0
  %993 = vmatpush1.msra.mxu0 0.0
  %994 = vmatprep.subr.mxu0 0.0
  %995 = vmatpush1.msra.mxu0 0.0
  %996 = vmatprep.subr.mxu0 0.0
  %997 = vmatpush1.msra.mxu0 0.0
  %998 = vmatprep.subr.mxu0 0.0
  %999 = vmatpush1.msra.mxu0 0.0
  %1000 = vmatprep.subr.mxu0 0.0
  %1001 = vmatpush1.msra.mxu0 0.0
  %1002 = vmatprep.subr.mxu0 0.0
  %1003 = vmatpush1.msra.mxu0 0.0
  %1004 = vmatprep.subr.mxu0 0.0
  %1005 = vmatpush1.msra.mxu0 0.0
  %1006 = vmatprep.mubr.f32.mxu0 0.0
  %1007 = vmatmul.mubr.f32.gmra.mrb[0].mxu0 %v940
  %v1008 = vpop.f32.mrb[0].mxu0
  %v1009 = vadd.f32 0.0, %v1008
  %v1010 = vpop.f32.mrb[0].mxu0
  %1011 = vdwg.mxu0
  %v1012 = vadd.f32 %v939, %v1009
  %v1013 = vtanh.pop %v1012
  %v1014 = vxor.u32 %v1012, 2147483648
  %v1015 = vmul.f32 %v1014, 1.442695
  %v1016 = vpow.pop %v1015
  %v1017 = vadd.f32 %v1016, 1.0
  %v1018 = vrcp.pop %v1017
  %v1019 = vmul.f32 1.0, %v1018
  %v1020 = vsel %vm36, %v1013, %v1019
  %v1021 = vmul.f32 %v1020, %v925
  %1023 = vrot.lane.b32.xlu0 %v1020, 64
  %v1024 = vpop.permute.xlu0 %1023
  %v1026 = vmul.f32 %v1020, %v1024
  %1028 = vrot.lane.b32.xlu0 %v1026, 32
  %v1029 = vpop.permute.xlu0 %1028
  %v1031 = vadd.f32 %v1021, %v1029
  %v1032 = vtanh.pop %v1031
  %1034 = vrot.lane.b32.xlu0 %v1032, 64
  %v1035 = vpop.permute.xlu0 %1034
  %v1037 = vmul.f32 %v1020, %v1035
  %1039 = vrot.lane.b32.xlu0 %v1037, 32
  %v1040 = vpop.permute.xlu0 %1039
  %s1042 = scalar_lea.vmem [#allocation2], 56
  %1043 = vst.msk [vmem:[%s1042] sm:$0xff] %vm197, %v1040
  %v1044 = vld [vmem:[%s4] sm:$0xff]
  %v1045 = vld [vmem:[%s4 + $0x8] sm:$0xff]
  %v1046 = vld [vmem:[%s4 + $0x10] sm:$0xff]
  %v1047 = vld [vmem:[%s4 + $0x18] sm:$0xff]
  %v1048 = vld [vmem:[%s5] sm:$0xff]
  %v1049 = vld [vmem:[%s5 + $0x8] sm:$0xff]
  %v1050 = vld [vmem:[%s5 + $0x10] sm:$0xff]
  %v1051 = vld [vmem:[%s5 + $0x18] sm:$0xff]
  %v1052 = vld [vmem:[%s6] sm:$0x1]
  %v1053 = vld [vmem:[#allocation2] sm:$0xff]
  %v1054 = vld [vmem:[#allocation2 + $0x8] sm:$0xff]
  %v1055 = vld [vmem:[#allocation2 + $0x10] sm:$0xff]
  %v1056 = vld [vmem:[#allocation2 + $0x18] sm:$0xff]
  %v1057 = vld [vmem:[#allocation2 + $0x20] sm:$0xff]
  %v1058 = vld [vmem:[#allocation2 + $0x28] sm:$0xff]
  %v1059 = vld [vmem:[#allocation2 + $0x30] sm:$0xff]
  %v1060 = vld [vmem:[#allocation2 + $0x38] sm:$0xff]
  %v1062 = vlaneseq
  %v1063 = vshrl.u32 %v1062, 7
  %v1064 = vsub.s32 0, %v1063
  %v1065 = vrot.slane %v1052, %v1064
  %v1068 = vsel %vm197, %v1053, 0
  %v1071 = vsel %vm197, %v1054, 0
  %v1074 = vsel %vm197, %v1055, 0
  %v1077 = vsel %vm197, %v1056, 0
  %v1080 = vsel %vm197, %v1057, 0
  %v1083 = vsel %vm197, %v1058, 0
  %v1086 = vsel %vm197, %v1059, 0
  %v1089 = vsel %vm197, %v1060, 0
  %1091 = vmatprep.subr.mxu0 0.0
  %1092 = vmatpush1.msra.mxu0 %v1044
  %1093 = vmatprep.subr.mxu0 0.0
  %1094 = vmatpush1.msra.mxu0 %v1045
  %1095 = vmatprep.subr.mxu0 0.0
  %1096 = vmatpush1.msra.mxu0 %v1046
  %1097 = vmatprep.subr.mxu0 0.0
  %1098 = vmatpush1.msra.mxu0 %v1047
  %1099 = vmatprep.subr.mxu0 0.0
  %1100 = vmatpush1.msra.mxu0 0.0
  %1101 = vmatprep.subr.mxu0 0.0
  %1102 = vmatpush1.msra.mxu0 0.0
  %1103 = vmatprep.subr.mxu0 0.0
  %1104 = vmatpush1.msra.mxu0 0.0
  %1105 = vmatprep.subr.mxu0 0.0
  %1106 = vmatpush1.msra.mxu0 0.0
  %1107 = vmatprep.subr.mxu0 0.0
  %1108 = vmatpush1.msra.mxu0 0.0
  %1109 = vmatprep.subr.mxu0 0.0
  %1110 = vmatpush1.msra.mxu0 0.0
  %1111 = vmatprep.subr.mxu0 0.0
  %1112 = vmatpush1.msra.mxu0 0.0
  %1113 = vmatprep.subr.mxu0 0.0
  %1114 = vmatpush1.msra.mxu0 0.0
  %1115 = vmatprep.subr.mxu0 0.0
  %1116 = vmatpush1.msra.mxu0 0.0
  %1117 = vmatprep.subr.mxu0 0.0
  %1118 = vmatpush1.msra.mxu0 0.0
  %1119 = vmatprep.subr.mxu0 0.0
  %1120 = vmatpush1.msra.mxu0 0.0
  %1121 = vmatprep.subr.mxu0 0.0
  %1122 = vmatpush1.msra.mxu0 0.0
  %1123 = vmatprep.subr.mxu0 0.0
  %1124 = vmatpush1.msra.mxu0 0.0
  %1125 = vmatprep.subr.mxu0 0.0
  %1126 = vmatpush1.msra.mxu0 0.0
  %1127 = vmatprep.subr.mxu0 0.0
  %1128 = vmatpush1.msra.mxu0 0.0
  %1129 = vmatprep.subr.mxu0 0.0
  %1130 = vmatpush1.msra.mxu0 0.0
  %1131 = vmatprep.subr.mxu0 0.0
  %1132 = vmatpush1.msra.mxu0 0.0
  %1133 = vmatprep.subr.mxu0 0.0
  %1134 = vmatpush1.msra.mxu0 0.0
  %1135 = vmatprep.subr.mxu0 0.0
  %1136 = vmatpush1.msra.mxu0 0.0
  %1137 = vmatprep.subr.mxu0 0.0
  %1138 = vmatpush1.msra.mxu0 0.0
  %1139 = vmatprep.subr.mxu0 0.0
  %1140 = vmatpush1.msra.mxu0 0.0
  %1141 = vmatprep.subr.mxu0 0.0
  %1142 = vmatpush1.msra.mxu0 0.0
  %1143 = vmatprep.subr.mxu0 0.0
  %1144 = vmatpush1.msra.mxu0 0.0
  %1145 = vmatprep.subr.mxu0 0.0
  %1146 = vmatpush1.msra.mxu0 0.0
  %1147 = vmatprep.subr.mxu0 0.0
  %1148 = vmatpush1.msra.mxu0 0.0
  %1149 = vmatprep.subr.mxu0 0.0
  %1150 = vmatpush1.msra.mxu0 0.0
  %1151 = vmatprep.subr.mxu0 0.0
  %1152 = vmatpush1.msra.mxu0 0.0
  %1153 = vmatprep.subr.mxu0 0.0
  %1154 = vmatpush1.msra.mxu0 0.0
  %1155 = vmatprep.mubr.f32.mxu0 0.0
  %1156 = vmatmul.mubr.f32.gmra.mrb[0].mxu0 %v1068
  %v1157 = vpop.f32.mrb[0].mxu0
  %v1158 = vadd.f32 %v1065, %v1157
  %v1159 = vpop.f32.mrb[0].mxu0
  %1160 = vmatprep.mubr.f32.mxu0 0.0
  %1161 = vmatmul.mubr.f32.gmra.mrb[0].mxu0 %v1071
  %v1162 = vpop.f32.mrb[0].mxu0
  %v1163 = vadd.f32 %v1065, %v1162
  %v1164 = vpop.f32.mrb[0].mxu0
  %1165 = vmatprep.mubr.f32.mxu0 0.0
  %1166 = vmatmul.mubr.f32.gmra.mrb[0].mxu0 %v1074
  %v1167 = vpop.f32.mrb[0].mxu0
  %v1168 = vadd.f32 %v1065, %v1167
  %v1169 = vpop.f32.mrb[0].mxu0
  %1170 = vmatprep.mubr.f32.mxu0 0.0
  %1171 = vmatmul.mubr.f32.gmra.mrb[0].mxu0 %v1077
  %v1172 = vpop.f32.mrb[0].mxu0
  %v1173 = vadd.f32 %v1065, %v1172
  %v1174 = vpop.f32.mrb[0].mxu0
  %1175 = vmatprep.mubr.f32.mxu0 0.0
  %1176 = vmatmul.mubr.f32.gmra.mrb[0].mxu0 %v1080
  %v1177 = vpop.f32.mrb[0].mxu0
  %v1178 = vadd.f32 %v1065, %v1177
  %v1179 = vpop.f32.mrb[0].mxu0
  %1180 = vmatprep.mubr.f32.mxu0 0.0
  %1181 = vmatmul.mubr.f32.gmra.mrb[0].mxu0 %v1083
  %v1182 = vpop.f32.mrb[0].mxu0
  %v1183 = vadd.f32 %v1065, %v1182
  %v1184 = vpop.f32.mrb[0].mxu0
  %1185 = vmatprep.mubr.f32.mxu0 0.0
  %1186 = vmatmul.mubr.f32.gmra.mrb[0].mxu0 %v1086
  %v1187 = vpop.f32.mrb[0].mxu0
  %v1188 = vadd.f32 %v1065, %v1187
  %v1189 = vpop.f32.mrb[0].mxu0
  %1190 = vmatprep.mubr.f32.mxu0 0.0
  %1191 = vmatmul.mubr.f32.gmra.mrb[0].mxu0 %v1089
  %v1192 = vpop.f32.mrb[0].mxu0
  %v1193 = vadd.f32 %v1065, %v1192
  %v1194 = vpop.f32.mrb[0].mxu0
  %1195 = vdwg.mxu0
  %1196 = vst [vmem:[#allocation3] sm:$0xff] %v1158
  %1197 = vst [vmem:[#allocation3 + $0x8] sm:$0xff] %v1163
  %1198 = vst [vmem:[#allocation3 + $0x10] sm:$0xff] %v1168
  %1199 = vst [vmem:[#allocation3 + $0x18] sm:$0xff] %v1173
  %1200 = vst [vmem:[#allocation3 + $0x20] sm:$0xff] %v1178
  %1201 = vst [vmem:[#allocation3 + $0x28] sm:$0xff] %v1183
  %1202 = vst [vmem:[#allocation3 + $0x30] sm:$0xff] %v1188
  %1203 = vst [vmem:[#allocation3 + $0x38] sm:$0xff] %v1193
  %v1204 = vld [vmem:[#allocation3] sm:$0xff]
  %1205 = vmatprep.subr.mxu0 0.0
  %1206 = vmatpush1.msra.mxu0 %v1048
  %1207 = vmatprep.subr.mxu0 0.0
  %1208 = vmatpush1.msra.mxu0 %v1049
  %1209 = vmatprep.subr.mxu0 0.0
  %1210 = vmatpush1.msra.mxu0 %v1050
  %1211 = vmatprep.subr.mxu0 0.0
  %1212 = vmatpush1.msra.mxu0 %v1051
  %1213 = vmatprep.subr.mxu0 0.0
  %1214 = vmatpush1.msra.mxu0 0.0
  %1215 = vmatprep.subr.mxu0 0.0
  %1216 = vmatpush1.msra.mxu0 0.0
  %1217 = vmatprep.subr.mxu0 0.0
  %1218 = vmatpush1.msra.mxu0 0.0
  %1219 = vmatprep.subr.mxu0 0.0
  %1220 = vmatpush1.msra.mxu0 0.0
  %1221 = vmatprep.subr.mxu0 0.0
  %1222 = vmatpush1.msra.mxu0 0.0
  %1223 = vmatprep.subr.mxu0 0.0
  %1224 = vmatpush1.msra.mxu0 0.0
  %1225 = vmatprep.subr.mxu0 0.0
  %1226 = vmatpush1.msra.mxu0 0.0
  %1227 = vmatprep.subr.mxu0 0.0
  %1228 = vmatpush1.msra.mxu0 0.0
  %1229 = vmatprep.subr.mxu0 0.0
  %1230 = vmatpush1.msra.mxu0 0.0
  %1231 = vmatprep.subr.mxu0 0.0
  %1232 = vmatpush1.msra.mxu0 0.0
  %1233 = vmatprep.subr.mxu0 0.0
  %1234 = vmatpush1.msra.mxu0 0.0
  %1235 = vmatprep.subr.mxu0 0.0
  %1236 = vmatpush1.msra.mxu0 0.0
  %1237 = vmatprep.subr.mxu0 0.0
  %1238 = vmatpush1.msra.mxu0 0.0
  %1239 = vmatprep.subr.mxu0 0.0
  %1240 = vmatpush1.msra.mxu0 0.0
  %1241 = vmatprep.subr.mxu0 0.0
  %1242 = vmatpush1.msra.mxu0 0.0
  %1243 = vmatprep.subr.mxu0 0.0
  %1244 = vmatpush1.msra.mxu0 0.0
  %1245 = vmatprep.subr.mxu0 0.0
  %1246 = vmatpush1.msra.mxu0 0.0
  %1247 = vmatprep.subr.mxu0 0.0
  %1248 = vmatpush1.msra.mxu0 0.0
  %1249 = vmatprep.subr.mxu0 0.0
  %1250 = vmatpush1.msra.mxu0 0.0
  %1251 = vmatprep.subr.mxu0 0.0
  %1252 = vmatpush1.msra.mxu0 0.0
  %1253 = vmatprep.subr.mxu0 0.0
  %1254 = vmatpush1.msra.mxu0 0.0
  %1255 = vmatprep.subr.mxu0 0.0
  %1256 = vmatpush1.msra.mxu0 0.0
  %1257 = vmatprep.subr.mxu0 0.0
  %1258 = vmatpush1.msra.mxu0 0.0
  %1259 = vmatprep.subr.mxu0 0.0
  %1260 = vmatpush1.msra.mxu0 0.0
  %1261 = vmatprep.subr.mxu0 0.0
  %1262 = vmatpush1.msra.mxu0 0.0
  %1263 = vmatprep.subr.mxu0 0.0
  %1264 = vmatpush1.msra.mxu0 0.0
  %1265 = vmatprep.subr.mxu0 0.0
  %1266 = vmatpush1.msra.mxu0 0.0
  %1267 = vmatprep.subr.mxu0 0.0
  %1268 = vmatpush1.msra.mxu0 0.0
  %1269 = vmatprep.mubr.f32.mxu0 0.0
  %1270 = vmatmul.mubr.f32.gmra.mrb[0].mxu0 %v199
  %v1271 = vpop.f32.mrb[0].mxu0
  %v1272 = vadd.f32 0.0, %v1271
  %v1273 = vpop.f32.mrb[0].mxu0
  %1274 = vdwg.mxu0
  %v1275 = vadd.f32 %v1204, %v1272
  %v1276 = vtanh.pop %v1275
  %v1277 = vxor.u32 %v1275, 2147483648
  %v1278 = vmul.f32 %v1277, 1.442695
  %v1279 = vpow.pop %v1278
  %v1280 = vadd.f32 %v1279, 1.0
  %v1281 = vrcp.pop %v1280
  %v1282 = vmul.f32 1.0, %v1281
  %v1283 = vsel %vm36, %v1276, %v1282
  %v1284 = vmul.f32 %v1283, 0.0
  %1286 = vrot.lane.b32.xlu0 %v1283, 64
  %v1287 = vpop.permute.xlu0 %1286
  %v1289 = vmul.f32 %v1283, %v1287
  %1291 = vrot.lane.b32.xlu0 %v1289, 32
  %v1292 = vpop.permute.xlu0 %1291
  %v1294 = vadd.f32 %v1284, %v1292
  %v1295 = vtanh.pop %v1294
  %1297 = vrot.lane.b32.xlu0 %v1295, 64
  %v1298 = vpop.permute.xlu0 %1297
  %v1300 = vmul.f32 %v1283, %v1298
  %v1301 = vld [vmem:[%s302] sm:$0xff]
  %1303 = vrot.lane.b32.xlu0 %v1300, 32
  %v1304 = vpop.permute.xlu0 %1303
  %v1305 = vsel %vm197, %v1304, 0
  %1307 = vmatprep.subr.mxu0 0.0
  %1308 = vmatpush1.msra.mxu0 %v1048
  %1309 = vmatprep.subr.mxu0 0.0
  %1310 = vmatpush1.msra.mxu0 %v1049
  %1311 = vmatprep.subr.mxu0 0.0
  %1312 = vmatpush1.msra.mxu0 %v1050
  %1313 = vmatprep.subr.mxu0 0.0
  %1314 = vmatpush1.msra.mxu0 %v1051
  %1315 = vmatprep.subr.mxu0 0.0
  %1316 = vmatpush1.msra.mxu0 0.0
  %1317 = vmatprep.subr.mxu0 0.0
  %1318 = vmatpush1.msra.mxu0 0.0
  %1319 = vmatprep.subr.mxu0 0.0
  %1320 = vmatpush1.msra.mxu0 0.0
  %1321 = vmatprep.subr.mxu0 0.0
  %1322 = vmatpush1.msra.mxu0 0.0
  %1323 = vmatprep.subr.mxu0 0.0
  %1324 = vmatpush1.msra.mxu0 0.0
  %1325 = vmatprep.subr.mxu0 0.0
  %1326 = vmatpush1.msra.mxu0 0.0
  %1327 = vmatprep.subr.mxu0 0.0
  %1328 = vmatpush1.msra.mxu0 0.0
  %1329 = vmatprep.subr.mxu0 0.0
  %1330 = vmatpush1.msra.mxu0 0.0
  %1331 = vmatprep.subr.mxu0 0.0
  %1332 = vmatpush1.msra.mxu0 0.0
  %1333 = vmatprep.subr.mxu0 0.0
  %1334 = vmatpush1.msra.mxu0 0.0
  %1335 = vmatprep.subr.mxu0 0.0
  %1336 = vmatpush1.msra.mxu0 0.0
  %1337 = vmatprep.subr.mxu0 0.0
  %1338 = vmatpush1.msra.mxu0 0.0
  %1339 = vmatprep.subr.mxu0 0.0
  %1340 = vmatpush1.msra.mxu0 0.0
  %1341 = vmatprep.subr.mxu0 0.0
  %1342 = vmatpush1.msra.mxu0 0.0
  %1343 = vmatprep.subr.mxu0 0.0
  %1344 = vmatpush1.msra.mxu0 0.0
  %1345 = vmatprep.subr.mxu0 0.0
  %1346 = vmatpush1.msra.mxu0 0.0
  %1347 = vmatprep.subr.mxu0 0.0
  %1348 = vmatpush1.msra.mxu0 0.0
  %1349 = vmatprep.subr.mxu0 0.0
  %1350 = vmatpush1.msra.mxu0 0.0
  %1351 = vmatprep.subr.mxu0 0.0
  %1352 = vmatpush1.msra.mxu0 0.0
  %1353 = vmatprep.subr.mxu0 0.0
  %1354 = vmatpush1.msra.mxu0 0.0
  %1355 = vmatprep.subr.mxu0 0.0
  %1356 = vmatpush1.msra.mxu0 0.0
  %1357 = vmatprep.subr.mxu0 0.0
  %1358 = vmatpush1.msra.mxu0 0.0
  %1359 = vmatprep.subr.mxu0 0.0
  %1360 = vmatpush1.msra.mxu0 0.0
  %1361 = vmatprep.subr.mxu0 0.0
  %1362 = vmatpush1.msra.mxu0 0.0
  %1363 = vmatprep.subr.mxu0 0.0
  %1364 = vmatpush1.msra.mxu0 0.0
  %1365 = vmatprep.subr.mxu0 0.0
  %1366 = vmatpush1.msra.mxu0 0.0
  %1367 = vmatprep.subr.mxu0 0.0
  %1368 = vmatpush1.msra.mxu0 0.0
  %1369 = vmatprep.subr.mxu0 0.0
  %1370 = vmatpush1.msra.mxu0 0.0
  %1371 = vmatprep.mubr.f32.mxu0 0.0
  %1372 = vmatmul.mubr.f32.gmra.mrb[0].mxu0 %v1305
  %v1373 = vpop.f32.mrb[0].mxu0
  %v1374 = vadd.f32 0.0, %v1373
  %v1375 = vpop.f32.mrb[0].mxu0
  %1376 = vdwg.mxu0
  %v1377 = vadd.f32 %v1301, %v1374
  %v1378 = vtanh.pop %v1377
  %v1379 = vxor.u32 %v1377, 2147483648
  %v1380 = vmul.f32 %v1379, 1.442695
  %v1381 = vpow.pop %v1380
  %v1382 = vadd.f32 %v1381, 1.0
  %v1383 = vrcp.pop %v1382
  %v1384 = vmul.f32 1.0, %v1383
  %v1385 = vsel %vm36, %v1378, %v1384
  %v1386 = vmul.f32 %v1385, %v1294
  %1388 = vrot.lane.b32.xlu0 %v1385, 64
  %v1389 = vpop.permute.xlu0 %1388
  %v1391 = vmul.f32 %v1385, %v1389
  %1393 = vrot.lane.b32.xlu0 %v1391, 32
  %v1394 = vpop.permute.xlu0 %1393
  %v1396 = vadd.f32 %v1386, %v1394
  %v1397 = vtanh.pop %v1396
  %1399 = vrot.lane.b32.xlu0 %v1397, 64
  %v1400 = vpop.permute.xlu0 %1399
  %v1402 = vmul.f32 %v1385, %v1400
  %v1403 = vld [vmem:[%s408] sm:$0xff]
  %1405 = vrot.lane.b32.xlu0 %v1402, 32
  %v1406 = vpop.permute.xlu0 %1405
  %v1407 = vsel %vm197, %v1406, 0
  %1409 = vmatprep.subr.mxu0 0.0
  %1410 = vmatpush1.msra.mxu0 %v1048
  %1411 = vmatprep.subr.mxu0 0.0
  %1412 = vmatpush1.msra.mxu0 %v1049
  %1413 = vmatprep.subr.mxu0 0.0
  %1414 = vmatpush1.msra.mxu0 %v1050
  %1415 = vmatprep.subr.mxu0 0.0
  %1416 = vmatpush1.msra.mxu0 %v1051
  %1417 = vmatprep.subr.mxu0 0.0
  %1418 = vmatpush1.msra.mxu0 0.0
  %1419 = vmatprep.subr.mxu0 0.0
  %1420 = vmatpush1.msra.mxu0 0.0
  %1421 = vmatprep.subr.mxu0 0.0
  %1422 = vmatpush1.msra.mxu0 0.0
  %1423 = vmatprep.subr.mxu0 0.0
  %1424 = vmatpush1.msra.mxu0 0.0
  %1425 = vmatprep.subr.mxu0 0.0
  %1426 = vmatpush1.msra.mxu0 0.0
  %1427 = vmatprep.subr.mxu0 0.0
  %1428 = vmatpush1.msra.mxu0 0.0
  %1429 = vmatprep.subr.mxu0 0.0
  %1430 = vmatpush1.msra.mxu0 0.0
  %1431 = vmatprep.subr.mxu0 0.0
  %1432 = vmatpush1.msra.mxu0 0.0
  %1433 = vmatprep.subr.mxu0 0.0
  %1434 = vmatpush1.msra.mxu0 0.0
  %1435 = vmatprep.subr.mxu0 0.0
  %1436 = vmatpush1.msra.mxu0 0.0
  %1437 = vmatprep.subr.mxu0 0.0
  %1438 = vmatpush1.msra.mxu0 0.0
  %1439 = vmatprep.subr.mxu0 0.0
  %1440 = vmatpush1.msra.mxu0 0.0
  %1441 = vmatprep.subr.mxu0 0.0
  %1442 = vmatpush1.msra.mxu0 0.0
  %1443 = vmatprep.subr.mxu0 0.0
  %1444 = vmatpush1.msra.mxu0 0.0
  %1445 = vmatprep.subr.mxu0 0.0
  %1446 = vmatpush1.msra.mxu0 0.0
  %1447 = vmatprep.subr.mxu0 0.0
  %1448 = vmatpush1.msra.mxu0 0.0
  %1449 = vmatprep.subr.mxu0 0.0
  %1450 = vmatpush1.msra.mxu0 0.0
  %1451 = vmatprep.subr.mxu0 0.0
  %1452 = vmatpush1.msra.mxu0 0.0
  %1453 = vmatprep.subr.mxu0 0.0
  %1454 = vmatpush1.msra.mxu0 0.0
  %1455 = vmatprep.subr.mxu0 0.0
  %1456 = vmatpush1.msra.mxu0 0.0
  %1457 = vmatprep.subr.mxu0 0.0
  %1458 = vmatpush1.msra.mxu0 0.0
  %1459 = vmatprep.subr.mxu0 0.0
  %1460 = vmatpush1.msra.mxu0 0.0
  %1461 = vmatprep.subr.mxu0 0.0
  %1462 = vmatpush1.msra.mxu0 0.0
  %1463 = vmatprep.subr.mxu0 0.0
  %1464 = vmatpush1.msra.mxu0 0.0
  %1465 = vmatprep.subr.mxu0 0.0
  %1466 = vmatpush1.msra.mxu0 0.0
  %1467 = vmatprep.subr.mxu0 0.0
  %1468 = vmatpush1.msra.mxu0 0.0
  %1469 = vmatprep.subr.mxu0 0.0
  %1470 = vmatpush1.msra.mxu0 0.0
  %1471 = vmatprep.subr.mxu0 0.0
  %1472 = vmatpush1.msra.mxu0 0.0
  %1473 = vmatprep.mubr.f32.mxu0 0.0
  %1474 = vmatmul.mubr.f32.gmra.mrb[0].mxu0 %v1407
  %v1475 = vpop.f32.mrb[0].mxu0
  %v1476 = vadd.f32 0.0, %v1475
  %v1477 = vpop.f32.mrb[0].mxu0
  %1478 = vdwg.mxu0
  %v1479 = vadd.f32 %v1403, %v1476
  %v1480 = vtanh.pop %v1479
  %v1481 = vxor.u32 %v1479, 2147483648
  %v1482 = vmul.f32 %v1481, 1.442695
  %v1483 = vpow.pop %v1482
  %v1484 = vadd.f32 %v1483, 1.0
  %v1485 = vrcp.pop %v1484
  %v1486 = vmul.f32 1.0, %v1485
  %v1487 = vsel %vm36, %v1480, %v1486
  %v1488 = vmul.f32 %v1487, %v1396
  %1490 = vrot.lane.b32.xlu0 %v1487, 64
  %v1491 = vpop.permute.xlu0 %1490
  %v1493 = vmul.f32 %v1487, %v1491
  %1495 = vrot.lane.b32.xlu0 %v1493, 32
  %v1496 = vpop.permute.xlu0 %1495
  %v1498 = vadd.f32 %v1488, %v1496
  %v1499 = vtanh.pop %v1498
  %1501 = vrot.lane.b32.xlu0 %v1499, 64
  %v1502 = vpop.permute.xlu0 %1501
  %v1504 = vmul.f32 %v1487, %v1502
  %v1505 = vld [vmem:[%s514] sm:$0xff]
  %1507 = vrot.lane.b32.xlu0 %v1504, 32
  %v1508 = vpop.permute.xlu0 %1507
  %v1509 = vsel %vm197, %v1508, 0
  %1511 = vmatprep.subr.mxu0 0.0
  %1512 = vmatpush1.msra.mxu0 %v1048
  %1513 = vmatprep.subr.mxu0 0.0
  %1514 = vmatpush1.msra.mxu0 %v1049
  %1515 = vmatprep.subr.mxu0 0.0
  %1516 = vmatpush1.msra.mxu0 %v1050
  %1517 = vmatprep.subr.mxu0 0.0
  %1518 = vmatpush1.msra.mxu0 %v1051
  %1519 = vmatprep.subr.mxu0 0.0
  %1520 = vmatpush1.msra.mxu0 0.0
  %1521 = vmatprep.subr.mxu0 0.0
  %1522 = vmatpush1.msra.mxu0 0.0
  %1523 = vmatprep.subr.mxu0 0.0
  %1524 = vmatpush1.msra.mxu0 0.0
  %1525 = vmatprep.subr.mxu0 0.0
  %1526 = vmatpush1.msra.mxu0 0.0
  %1527 = vmatprep.subr.mxu0 0.0
  %1528 = vmatpush1.msra.mxu0 0.0
  %1529 = vmatprep.subr.mxu0 0.0
  %1530 = vmatpush1.msra.mxu0 0.0
  %1531 = vmatprep.subr.mxu0 0.0
  %1532 = vmatpush1.msra.mxu0 0.0
  %1533 = vmatprep.subr.mxu0 0.0
  %1534 = vmatpush1.msra.mxu0 0.0
  %1535 = vmatprep.subr.mxu0 0.0
  %1536 = vmatpush1.msra.mxu0 0.0
  %1537 = vmatprep.subr.mxu0 0.0
  %1538 = vmatpush1.msra.mxu0 0.0
  %1539 = vmatprep.subr.mxu0 0.0
  %1540 = vmatpush1.msra.mxu0 0.0
  %1541 = vmatprep.subr.mxu0 0.0
  %1542 = vmatpush1.msra.mxu0 0.0
  %1543 = vmatprep.subr.mxu0 0.0
  %1544 = vmatpush1.msra.mxu0 0.0
  %1545 = vmatprep.subr.mxu0 0.0
  %1546 = vmatpush1.msra.mxu0 0.0
  %1547 = vmatprep.subr.mxu0 0.0
  %1548 = vmatpush1.msra.mxu0 0.0
  %1549 = vmatprep.subr.mxu0 0.0
  %1550 = vmatpush1.msra.mxu0 0.0
  %1551 = vmatprep.subr.mxu0 0.0
  %1552 = vmatpush1.msra.mxu0 0.0
  %1553 = vmatprep.subr.mxu0 0.0
  %1554 = vmatpush1.msra.mxu0 0.0
  %1555 = vmatprep.subr.mxu0 0.0
  %1556 = vmatpush1.msra.mxu0 0.0
  %1557 = vmatprep.subr.mxu0 0.0
  %1558 = vmatpush1.msra.mxu0 0.0
  %1559 = vmatprep.subr.mxu0 0.0
  %1560 = vmatpush1.msra.mxu0 0.0
  %1561 = vmatprep.subr.mxu0 0.0
  %1562 = vmatpush1.msra.mxu0 0.0
  %1563 = vmatprep.subr.mxu0 0.0
  %1564 = vmatpush1.msra.mxu0 0.0
  %1565 = vmatprep.subr.mxu0 0.0
  %1566 = vmatpush1.msra.mxu0 0.0
  %1567 = vmatprep.subr.mxu0 0.0
  %1568 = vmatpush1.msra.mxu0 0.0
  %1569 = vmatprep.subr.mxu0 0.0
  %1570 = vmatpush1.msra.mxu0 0.0
  %1571 = vmatprep.subr.mxu0 0.0
  %1572 = vmatpush1.msra.mxu0 0.0
  %1573 = vmatprep.subr.mxu0 0.0
  %1574 = vmatpush1.msra.mxu0 0.0
  %1575 = vmatprep.mubr.f32.mxu0 0.0
  %1576 = vmatmul.mubr.f32.gmra.mrb[0].mxu0 %v1509
  %v1577 = vpop.f32.mrb[0].mxu0
  %v1578 = vadd.f32 0.0, %v1577
  %v1579 = vpop.f32.mrb[0].mxu0
  %1580 = vdwg.mxu0
  %v1581 = vadd.f32 %v1505, %v1578
  %v1582 = vtanh.pop %v1581
  %v1583 = vxor.u32 %v1581, 2147483648
  %v1584 = vmul.f32 %v1583, 1.442695
  %v1585 = vpow.pop %v1584
  %v1586 = vadd.f32 %v1585, 1.0
  %v1587 = vrcp.pop %v1586
  %v1588 = vmul.f32 1.0, %v1587
  %v1589 = vsel %vm36, %v1582, %v1588
  %v1590 = vmul.f32 %v1589, %v1498
  %1592 = vrot.lane.b32.xlu0 %v1589, 64
  %v1593 = vpop.permute.xlu0 %1592
  %v1595 = vmul.f32 %v1589, %v1593
  %1597 = vrot.lane.b32.xlu0 %v1595, 32
  %v1598 = vpop.permute.xlu0 %1597
  %v1600 = vadd.f32 %v1590, %v1598
  %v1601 = vtanh.pop %v1600
  %1603 = vrot.lane.b32.xlu0 %v1601, 64
  %v1604 = vpop.permute.xlu0 %1603
  %v1606 = vmul.f32 %v1589, %v1604
  %v1607 = vld [vmem:[%s620] sm:$0xff]
  %1609 = vrot.lane.b32.xlu0 %v1606, 32
  %v1610 = vpop.permute.xlu0 %1609
  %v1611 = vsel %vm197, %v1610, 0
  %1613 = vmatprep.subr.mxu0 0.0
  %1614 = vmatpush1.msra.mxu0 %v1048
  %1615 = vmatprep.subr.mxu0 0.0
  %1616 = vmatpush1.msra.mxu0 %v1049
  %1617 = vmatprep.subr.mxu0 0.0
  %1618 = vmatpush1.msra.mxu0 %v1050
  %1619 = vmatprep.subr.mxu0 0.0
  %1620 = vmatpush1.msra.mxu0 %v1051
  %1621 = vmatprep.subr.mxu0 0.0
  %1622 = vmatpush1.msra.mxu0 0.0
  %1623 = vmatprep.subr.mxu0 0.0
  %1624 = vmatpush1.msra.mxu0 0.0
  %1625 = vmatprep.subr.mxu0 0.0
  %1626 = vmatpush1.msra.mxu0 0.0
  %1627 = vmatprep.subr.mxu0 0.0
  %1628 = vmatpush1.msra.mxu0 0.0
  %1629 = vmatprep.subr.mxu0 0.0
  %1630 = vmatpush1.msra.mxu0 0.0
  %1631 = vmatprep.subr.mxu0 0.0
  %1632 = vmatpush1.msra.mxu0 0.0
  %1633 = vmatprep.subr.mxu0 0.0
  %1634 = vmatpush1.msra.mxu0 0.0
  %1635 = vmatprep.subr.mxu0 0.0
  %1636 = vmatpush1.msra.mxu0 0.0
  %1637 = vmatprep.subr.mxu0 0.0
  %1638 = vmatpush1.msra.mxu0 0.0
  %1639 = vmatprep.subr.mxu0 0.0
  %1640 = vmatpush1.msra.mxu0 0.0
  %1641 = vmatprep.subr.mxu0 0.0
  %1642 = vmatpush1.msra.mxu0 0.0
  %1643 = vmatprep.subr.mxu0 0.0
  %1644 = vmatpush1.msra.mxu0 0.0
  %1645 = vmatprep.subr.mxu0 0.0
  %1646 = vmatpush1.msra.mxu0 0.0
  %1647 = vmatprep.subr.mxu0 0.0
  %1648 = vmatpush1.msra.mxu0 0.0
  %1649 = vmatprep.subr.mxu0 0.0
  %1650 = vmatpush1.msra.mxu0 0.0
  %1651 = vmatprep.subr.mxu0 0.0
  %1652 = vmatpush1.msra.mxu0 0.0
  %1653 = vmatprep.subr.mxu0 0.0
  %1654 = vmatpush1.msra.mxu0 0.0
  %1655 = vmatprep.subr.mxu0 0.0
  %1656 = vmatpush1.msra.mxu0 0.0
  %1657 = vmatprep.subr.mxu0 0.0
  %1658 = vmatpush1.msra.mxu0 0.0
  %1659 = vmatprep.subr.mxu0 0.0
  %1660 = vmatpush1.msra.mxu0 0.0
  %1661 = vmatprep.subr.mxu0 0.0
  %1662 = vmatpush1.msra.mxu0 0.0
  %1663 = vmatprep.subr.mxu0 0.0
  %1664 = vmatpush1.msra.mxu0 0.0
  %1665 = vmatprep.subr.mxu0 0.0
  %1666 = vmatpush1.msra.mxu0 0.0
  %1667 = vmatprep.subr.mxu0 0.0
  %1668 = vmatpush1.msra.mxu0 0.0
  %1669 = vmatprep.subr.mxu0 0.0
  %1670 = vmatpush1.msra.mxu0 0.0
  %1671 = vmatprep.subr.mxu0 0.0
  %1672 = vmatpush1.msra.mxu0 0.0
  %1673 = vmatprep.subr.mxu0 0.0
  %1674 = vmatpush1.msra.mxu0 0.0
  %1675 = vmatprep.subr.mxu0 0.0
  %1676 = vmatpush1.msra.mxu0 0.0
  %1677 = vmatprep.mubr.f32.mxu0 0.0
  %1678 = vmatmul.mubr.f32.gmra.mrb[0].mxu0 %v1611
  %v1679 = vpop.f32.mrb[0].mxu0
  %v1680 = vadd.f32 0.0, %v1679
  %v1681 = vpop.f32.mrb[0].mxu0
  %1682 = vdwg.mxu0
  %v1683 = vadd.f32 %v1607, %v1680
  %v1684 = vtanh.pop %v1683
  %v1685 = vxor.u32 %v1683, 2147483648
  %v1686 = vmul.f32 %v1685, 1.442695
  %v1687 = vpow.pop %v1686
  %v1688 = vadd.f32 %v1687, 1.0
  %v1689 = vrcp.pop %v1688
  %v1690 = vmul.f32 1.0, %v1689
  %v1691 = vsel %vm36, %v1684, %v1690
  %v1692 = vmul.f32 %v1691, %v1600
  %1694 = vrot.lane.b32.xlu0 %v1691, 64
  %v1695 = vpop.permute.xlu0 %1694
  %v1697 = vmul.f32 %v1691, %v1695
  %1699 = vrot.lane.b32.xlu0 %v1697, 32
  %v1700 = vpop.permute.xlu0 %1699
  %v1702 = vadd.f32 %v1692, %v1700
  %v1703 = vtanh.pop %v1702
  %1705 = vrot.lane.b32.xlu0 %v1703, 64
  %v1706 = vpop.permute.xlu0 %1705
  %v1708 = vmul.f32 %v1691, %v1706
  %v1709 = vld [vmem:[%s726] sm:$0xff]
  %1711 = vrot.lane.b32.xlu0 %v1708, 32
  %v1712 = vpop.permute.xlu0 %1711
  %v1713 = vsel %vm197, %v1712, 0
  %1715 = vmatprep.subr.mxu0 0.0
  %1716 = vmatpush1.msra.mxu0 %v1048
  %1717 = vmatprep.subr.mxu0 0.0
  %1718 = vmatpush1.msra.mxu0 %v1049
  %1719 = vmatprep.subr.mxu0 0.0
  %1720 = vmatpush1.msra.mxu0 %v1050
  %1721 = vmatprep.subr.mxu0 0.0
  %1722 = vmatpush1.msra.mxu0 %v1051
  %1723 = vmatprep.subr.mxu0 0.0
  %1724 = vmatpush1.msra.mxu0 0.0
  %1725 = vmatprep.subr.mxu0 0.0
  %1726 = vmatpush1.msra.mxu0 0.0
  %1727 = vmatprep.subr.mxu0 0.0
  %1728 = vmatpush1.msra.mxu0 0.0
  %1729 = vmatprep.subr.mxu0 0.0
  %1730 = vmatpush1.msra.mxu0 0.0
  %1731 = vmatprep.subr.mxu0 0.0
  %1732 = vmatpush1.msra.mxu0 0.0
  %1733 = vmatprep.subr.mxu0 0.0
  %1734 = vmatpush1.msra.mxu0 0.0
  %1735 = vmatprep.subr.mxu0 0.0
  %1736 = vmatpush1.msra.mxu0 0.0
  %1737 = vmatprep.subr.mxu0 0.0
  %1738 = vmatpush1.msra.mxu0 0.0
  %1739 = vmatprep.subr.mxu0 0.0
  %1740 = vmatpush1.msra.mxu0 0.0
  %1741 = vmatprep.subr.mxu0 0.0
  %1742 = vmatpush1.msra.mxu0 0.0
  %1743 = vmatprep.subr.mxu0 0.0
  %1744 = vmatpush1.msra.mxu0 0.0
  %1745 = vmatprep.subr.mxu0 0.0
  %1746 = vmatpush1.msra.mxu0 0.0
  %1747 = vmatprep.subr.mxu0 0.0
  %1748 = vmatpush1.msra.mxu0 0.0
  %1749 = vmatprep.subr.mxu0 0.0
  %1750 = vmatpush1.msra.mxu0 0.0
  %1751 = vmatprep.subr.mxu0 0.0
  %1752 = vmatpush1.msra.mxu0 0.0
  %1753 = vmatprep.subr.mxu0 0.0
  %1754 = vmatpush1.msra.mxu0 0.0
  %1755 = vmatprep.subr.mxu0 0.0
  %1756 = vmatpush1.msra.mxu0 0.0
  %1757 = vmatprep.subr.mxu0 0.0
  %1758 = vmatpush1.msra.mxu0 0.0
  %1759 = vmatprep.subr.mxu0 0.0
  %1760 = vmatpush1.msra.mxu0 0.0
  %1761 = vmatprep.subr.mxu0 0.0
  %1762 = vmatpush1.msra.mxu0 0.0
  %1763 = vmatprep.subr.mxu0 0.0
  %1764 = vmatpush1.msra.mxu0 0.0
  %1765 = vmatprep.subr.mxu0 0.0
  %1766 = vmatpush1.msra.mxu0 0.0
  %1767 = vmatprep.subr.mxu0 0.0
  %1768 = vmatpush1.msra.mxu0 0.0
  %1769 = vmatprep.subr.mxu0 0.0
  %1770 = vmatpush1.msra.mxu0 0.0
  %1771 = vmatprep.subr.mxu0 0.0
  %1772 = vmatpush1.msra.mxu0 0.0
  %1773 = vmatprep.subr.mxu0 0.0
  %1774 = vmatpush1.msra.mxu0 0.0
  %1775 = vmatprep.subr.mxu0 0.0
  %1776 = vmatpush1.msra.mxu0 0.0
  %1777 = vmatprep.subr.mxu0 0.0
  %1778 = vmatpush1.msra.mxu0 0.0
  %1779 = vmatprep.mubr.f32.mxu0 0.0
  %1780 = vmatmul.mubr.f32.gmra.mrb[0].mxu0 %v1713
  %v1781 = vpop.f32.mrb[0].mxu0
  %v1782 = vadd.f32 0.0, %v1781
  %v1783 = vpop.f32.mrb[0].mxu0
  %1784 = vdwg.mxu0
  %v1785 = vadd.f32 %v1709, %v1782
  %v1786 = vtanh.pop %v1785
  %v1787 = vxor.u32 %v1785, 2147483648
  %v1788 = vmul.f32 %v1787, 1.442695
  %v1789 = vpow.pop %v1788
  %v1790 = vadd.f32 %v1789, 1.0
  %v1791 = vrcp.pop %v1790
  %v1792 = vmul.f32 1.0, %v1791
  %v1793 = vsel %vm36, %v1786, %v1792
  %v1794 = vmul.f32 %v1793, %v1702
  %1796 = vrot.lane.b32.xlu0 %v1793, 64
  %v1797 = vpop.permute.xlu0 %1796
  %v1799 = vmul.f32 %v1793, %v1797
  %1801 = vrot.lane.b32.xlu0 %v1799, 32
  %v1802 = vpop.permute.xlu0 %1801
  %v1804 = vadd.f32 %v1794, %v1802
  %v1805 = vtanh.pop %v1804
  %1807 = vrot.lane.b32.xlu0 %v1805, 64
  %v1808 = vpop.permute.xlu0 %1807
  %v1810 = vmul.f32 %v1793, %v1808
  %v1811 = vld [vmem:[%s832] sm:$0xff]
  %1813 = vrot.lane.b32.xlu0 %v1810, 32
  %v1814 = vpop.permute.xlu0 %1813
  %v1815 = vsel %vm197, %v1814, 0
  %1817 = vmatprep.subr.mxu0 0.0
  %1818 = vmatpush1.msra.mxu0 %v1048
  %1819 = vmatprep.subr.mxu0 0.0
  %1820 = vmatpush1.msra.mxu0 %v1049
  %1821 = vmatprep.subr.mxu0 0.0
  %1822 = vmatpush1.msra.mxu0 %v1050
  %1823 = vmatprep.subr.mxu0 0.0
  %1824 = vmatpush1.msra.mxu0 %v1051
  %1825 = vmatprep.subr.mxu0 0.0
  %1826 = vmatpush1.msra.mxu0 0.0
  %1827 = vmatprep.subr.mxu0 0.0
  %1828 = vmatpush1.msra.mxu0 0.0
  %1829 = vmatprep.subr.mxu0 0.0
  %1830 = vmatpush1.msra.mxu0 0.0
  %1831 = vmatprep.subr.mxu0 0.0
  %1832 = vmatpush1.msra.mxu0 0.0
  %1833 = vmatprep.subr.mxu0 0.0
  %1834 = vmatpush1.msra.mxu0 0.0
  %1835 = vmatprep.subr.mxu0 0.0
  %1836 = vmatpush1.msra.mxu0 0.0
  %1837 = vmatprep.subr.mxu0 0.0
  %1838 = vmatpush1.msra.mxu0 0.0
  %1839 = vmatprep.subr.mxu0 0.0
  %1840 = vmatpush1.msra.mxu0 0.0
  %1841 = vmatprep.subr.mxu0 0.0
  %1842 = vmatpush1.msra.mxu0 0.0
  %1843 = vmatprep.subr.mxu0 0.0
  %1844 = vmatpush1.msra.mxu0 0.0
  %1845 = vmatprep.subr.mxu0 0.0
  %1846 = vmatpush1.msra.mxu0 0.0
  %1847 = vmatprep.subr.mxu0 0.0
  %1848 = vmatpush1.msra.mxu0 0.0
  %1849 = vmatprep.subr.mxu0 0.0
  %1850 = vmatpush1.msra.mxu0 0.0
  %1851 = vmatprep.subr.mxu0 0.0
  %1852 = vmatpush1.msra.mxu0 0.0
  %1853 = vmatprep.subr.mxu0 0.0
  %1854 = vmatpush1.msra.mxu0 0.0
  %1855 = vmatprep.subr.mxu0 0.0
  %1856 = vmatpush1.msra.mxu0 0.0
  %1857 = vmatprep.subr.mxu0 0.0
  %1858 = vmatpush1.msra.mxu0 0.0
  %1859 = vmatprep.subr.mxu0 0.0
  %1860 = vmatpush1.msra.mxu0 0.0
  %1861 = vmatprep.subr.mxu0 0.0
  %1862 = vmatpush1.msra.mxu0 0.0
  %1863 = vmatprep.subr.mxu0 0.0
  %1864 = vmatpush1.msra.mxu0 0.0
  %1865 = vmatprep.subr.mxu0 0.0
  %1866 = vmatpush1.msra.mxu0 0.0
  %1867 = vmatprep.subr.mxu0 0.0
  %1868 = vmatpush1.msra.mxu0 0.0
  %1869 = vmatprep.subr.mxu0 0.0
  %1870 = vmatpush1.msra.mxu0 0.0
  %1871 = vmatprep.subr.mxu0 0.0
  %1872 = vmatpush1.msra.mxu0 0.0
  %1873 = vmatprep.subr.mxu0 0.0
  %1874 = vmatpush1.msra.mxu0 0.0
  %1875 = vmatprep.subr.mxu0 0.0
  %1876 = vmatpush1.msra.mxu0 0.0
  %1877 = vmatprep.subr.mxu0 0.0
  %1878 = vmatpush1.msra.mxu0 0.0
  %1879 = vmatprep.subr.mxu0 0.0
  %1880 = vmatpush1.msra.mxu0 0.0
  %1881 = vmatprep.mubr.f32.mxu0 0.0
  %1882 = vmatmul.mubr.f32.gmra.mrb[0].mxu0 %v1815
  %v1883 = vpop.f32.mrb[0].mxu0
  %v1884 = vadd.f32 0.0, %v1883
  %v1885 = vpop.f32.mrb[0].mxu0
  %1886 = vdwg.mxu0
  %v1887 = vadd.f32 %v1811, %v1884
  %v1888 = vtanh.pop %v1887
  %v1889 = vxor.u32 %v1887, 2147483648
  %v1890 = vmul.f32 %v1889, 1.442695
  %v1891 = vpow.pop %v1890
  %v1892 = vadd.f32 %v1891, 1.0
  %v1893 = vrcp.pop %v1892
  %v1894 = vmul.f32 1.0, %v1893
  %v1895 = vsel %vm36, %v1888, %v1894
  %v1896 = vmul.f32 %v1895, %v1804
  %1898 = vrot.lane.b32.xlu0 %v1895, 64
  %v1899 = vpop.permute.xlu0 %1898
  %v1901 = vmul.f32 %v1895, %v1899
  %1903 = vrot.lane.b32.xlu0 %v1901, 32
  %v1904 = vpop.permute.xlu0 %1903
  %v1906 = vadd.f32 %v1896, %v1904
  %v1907 = vtanh.pop %v1906
  %1909 = vrot.lane.b32.xlu0 %v1907, 64
  %v1910 = vpop.permute.xlu0 %1909
  %v1912 = vmul.f32 %v1895, %v1910
  %v1913 = vld [vmem:[%s938] sm:$0xff]
  %1915 = vrot.lane.b32.xlu0 %v1912, 32
  %v1916 = vpop.permute.xlu0 %1915
  %v1917 = vsel %vm197, %v1916, 0
  %1919 = vmatprep.subr.mxu0 0.0
  %1920 = vmatpush1.msra.mxu0 %v1048
  %1921 = vmatprep.subr.mxu0 0.0
  %1922 = vmatpush1.msra.mxu0 %v1049
  %1923 = vmatprep.subr.mxu0 0.0
  %1924 = vmatpush1.msra.mxu0 %v1050
  %1925 = vmatprep.subr.mxu0 0.0
  %1926 = vmatpush1.msra.mxu0 %v1051
  %1927 = vmatprep.subr.mxu0 0.0
  %1928 = vmatpush1.msra.mxu0 0.0
  %1929 = vmatprep.subr.mxu0 0.0
  %1930 = vmatpush1.msra.mxu0 0.0
  %1931 = vmatprep.subr.mxu0 0.0
  %1932 = vmatpush1.msra.mxu0 0.0
  %1933 = vmatprep.subr.mxu0 0.0
  %1934 = vmatpush1.msra.mxu0 0.0
  %1935 = vmatprep.subr.mxu0 0.0
  %1936 = vmatpush1.msra.mxu0 0.0
  %1937 = vmatprep.subr.mxu0 0.0
  %1938 = vmatpush1.msra.mxu0 0.0
  %1939 = vmatprep.subr.mxu0 0.0
  %1940 = vmatpush1.msra.mxu0 0.0
  %1941 = vmatprep.subr.mxu0 0.0
  %1942 = vmatpush1.msra.mxu0 0.0
  %1943 = vmatprep.subr.mxu0 0.0
  %1944 = vmatpush1.msra.mxu0 0.0
  %1945 = vmatprep.subr.mxu0 0.0
  %1946 = vmatpush1.msra.mxu0 0.0
  %1947 = vmatprep.subr.mxu0 0.0
  %1948 = vmatpush1.msra.mxu0 0.0
  %1949 = vmatprep.subr.mxu0 0.0
  %1950 = vmatpush1.msra.mxu0 0.0
  %1951 = vmatprep.subr.mxu0 0.0
  %1952 = vmatpush1.msra.mxu0 0.0
  %1953 = vmatprep.subr.mxu0 0.0
  %1954 = vmatpush1.msra.mxu0 0.0
  %1955 = vmatprep.subr.mxu0 0.0
  %1956 = vmatpush1.msra.mxu0 0.0
  %1957 = vmatprep.subr.mxu0 0.0
  %1958 = vmatpush1.msra.mxu0 0.0
  %1959 = vmatprep.subr.mxu0 0.0
  %1960 = vmatpush1.msra.mxu0 0.0
  %1961 = vmatprep.subr.mxu0 0.0
  %1962 = vmatpush1.msra.mxu0 0.0
  %1963 = vmatprep.subr.mxu0 0.0
  %1964 = vmatpush1.msra.mxu0 0.0
  %1965 = vmatprep.subr.mxu0 0.0
  %1966 = vmatpush1.msra.mxu0 0.0
  %1967 = vmatprep.subr.mxu0 0.0
  %1968 = vmatpush1.msra.mxu0 0.0
  %1969 = vmatprep.subr.mxu0 0.0
  %1970 = vmatpush1.msra.mxu0 0.0
  %1971 = vmatprep.subr.mxu0 0.0
  %1972 = vmatpush1.msra.mxu0 0.0
  %1973 = vmatprep.subr.mxu0 0.0
  %1974 = vmatpush1.msra.mxu0 0.0
  %1975 = vmatprep.subr.mxu0 0.0
  %1976 = vmatpush1.msra.mxu0 0.0
  %1977 = vmatprep.subr.mxu0 0.0
  %1978 = vmatpush1.msra.mxu0 0.0
  %1979 = vmatprep.subr.mxu0 0.0
  %1980 = vmatpush1.msra.mxu0 0.0
  %1981 = vmatprep.subr.mxu0 0.0
  %1982 = vmatpush1.msra.mxu0 0.0
  %1983 = vmatprep.mubr.f32.mxu0 0.0
  %1984 = vmatmul.mubr.f32.gmra.mrb[0].mxu0 %v1917
  %v1985 = vpop.f32.mrb[0].mxu0
  %v1986 = vadd.f32 0.0, %v1985
  %v1987 = vpop.f32.mrb[0].mxu0
  %1988 = vdwg.mxu0
  %v1989 = vadd.f32 %v1913, %v1986
  %v1990 = vtanh.pop %v1989
  %v1991 = vxor.u32 %v1989, 2147483648
  %v1992 = vmul.f32 %v1991, 1.442695
  %v1993 = vpow.pop %v1992
  %v1994 = vadd.f32 %v1993, 1.0
  %v1995 = vrcp.pop %v1994
  %v1996 = vmul.f32 1.0, %v1995
  %v1997 = vsel %vm36, %v1990, %v1996
  %v1998 = vmul.f32 %v1997, %v1906
  %2000 = vrot.lane.b32.xlu0 %v1997, 64
  %v2001 = vpop.permute.xlu0 %2000
  %v2003 = vmul.f32 %v1997, %v2001
  %2005 = vrot.lane.b32.xlu0 %v2003, 32
  %v2006 = vpop.permute.xlu0 %2005
  %v2008 = vadd.f32 %v1998, %v2006
  %v2009 = vtanh.pop %v2008
  %2011 = vrot.lane.b32.xlu0 %v2009, 64
  %v2012 = vpop.permute.xlu0 %2011
  %v2014 = vmul.f32 %v1997, %v2012
  %v2015 = vld [vmem:[%s7] sm:$0xff]
  %v2016 = vld [vmem:[%s7 + $0x8] sm:$0xff]
  %v2017 = vld [vmem:[%s7 + $0x10] sm:$0xff]
  %v2018 = vld [vmem:[%s7 + $0x18] sm:$0xff]
  %v2019 = vld [vmem:[%s8] sm:$0x1]
  %v2021 = vlaneseq
  %v2022 = vshrl.u32 %v2021, 7
  %v2023 = vsub.s32 0, %v2022
  %v2024 = vrot.slane %v2019, %v2023
  %2027 = vrot.lane.b32.xlu0 %v2014, 32
  %v2028 = vpop.permute.xlu0 %2027
  %v2029 = vsel %vm197, %v2028, 0
  %2031 = vmatprep.subr.mxu0 0.0
  %2032 = vmatpush1.msra.mxu0 %v2015
  %2033 = vmatprep.subr.mxu0 0.0
  %2034 = vmatpush1.msra.mxu0 %v2016
  %2035 = vmatprep.subr.mxu0 0.0
  %2036 = vmatpush1.msra.mxu0 %v2017
  %2037 = vmatprep.subr.mxu0 0.0
  %2038 = vmatpush1.msra.mxu0 %v2018
  %2039 = vmatprep.subr.mxu0 0.0
  %2040 = vmatpush1.msra.mxu0 0.0
  %2041 = vmatprep.subr.mxu0 0.0
  %2042 = vmatpush1.msra.mxu0 0.0
  %2043 = vmatprep.subr.mxu0 0.0
  %2044 = vmatpush1.msra.mxu0 0.0
  %2045 = vmatprep.subr.mxu0 0.0
  %2046 = vmatpush1.msra.mxu0 0.0
  %2047 = vmatprep.subr.mxu0 0.0
  %2048 = vmatpush1.msra.mxu0 0.0
  %2049 = vmatprep.subr.mxu0 0.0
  %2050 = vmatpush1.msra.mxu0 0.0
  %2051 = vmatprep.subr.mxu0 0.0
  %2052 = vmatpush1.msra.mxu0 0.0
  %2053 = vmatprep.subr.mxu0 0.0
  %2054 = vmatpush1.msra.mxu0 0.0
  %2055 = vmatprep.subr.mxu0 0.0
  %2056 = vmatpush1.msra.mxu0 0.0
  %2057 = vmatprep.subr.mxu0 0.0
  %2058 = vmatpush1.msra.mxu0 0.0
  %2059 = vmatprep.subr.mxu0 0.0
  %2060 = vmatpush1.msra.mxu0 0.0
  %2061 = vmatprep.subr.mxu0 0.0
  %2062 = vmatpush1.msra.mxu0 0.0
  %2063 = vmatprep.subr.mxu0 0.0
  %2064 = vmatpush1.msra.mxu0 0.0
  %2065 = vmatprep.subr.mxu0 0.0
  %2066 = vmatpush1.msra.mxu0 0.0
  %2067 = vmatprep.subr.mxu0 0.0
  %2068 = vmatpush1.msra.mxu0 0.0
  %2069 = vmatprep.subr.mxu0 0.0
  %2070 = vmatpush1.msra.mxu0 0.0
  %2071 = vmatprep.subr.mxu0 0.0
  %2072 = vmatpush1.msra.mxu0 0.0
  %2073 = vmatprep.subr.mxu0 0.0
  %2074 = vmatpush1.msra.mxu0 0.0
  %2075 = vmatprep.subr.mxu0 0.0
  %2076 = vmatpush1.msra.mxu0 0.0
  %2077 = vmatprep.subr.mxu0 0.0
  %2078 = vmatpush1.msra.mxu0 0.0
  %2079 = vmatprep.subr.mxu0 0.0
  %2080 = vmatpush1.msra.mxu0 0.0
  %2081 = vmatprep.subr.mxu0 0.0
  %2082 = vmatpush1.msra.mxu0 0.0
  %2083 = vmatprep.subr.mxu0 0.0
  %2084 = vmatpush1.msra.mxu0 0.0
  %2085 = vmatprep.subr.mxu0 0.0
  %2086 = vmatpush1.msra.mxu0 0.0
  %2087 = vmatprep.subr.mxu0 0.0
  %2088 = vmatpush1.msra.mxu0 0.0
  %2089 = vmatprep.subr.mxu0 0.0
  %2090 = vmatpush1.msra.mxu0 0.0
  %2091 = vmatprep.subr.mxu0 0.0
  %2092 = vmatpush1.msra.mxu0 0.0
  %2093 = vmatprep.subr.mxu0 0.0
  %2094 = vmatpush1.msra.mxu0 0.0
  %2095 = vmatprep.mubr.f32.mxu0 0.0
  %2096 = vmatmul.mubr.f32.gmra.mrb[0].mxu0 %v2029
  %v2097 = vpop.f32.mrb[0].mxu0
  %v2098 = vadd.f32 %v2024, %v2097
  %v2099 = vpop.f32.mrb[0].mxu0
  %2100 = vdwg.mxu0
  %vm2101 = vcmask 31744
  %2102 = vst.msk [vmem:[%s9] sm:$0xff] %vm2101, %v2098
  // Predicated region
  $region38: #{_rnn_forward_impl.1} parent=0 // pred_check
    _
  $region39: #{_rnn_forward_impl.1} parent=0 // pred_check_branch
    %2104 = sbr.rel (0) target = $region41
  $region40: #{_rnn_forward_impl.1} parent=0 // pred_region
    _
  $region41: #{_rnn_forward_impl.1} parent=0 // pred_fallthru
    _
  // Predicated region
  $region42: #{_rnn_forward_impl.1} parent=0 // pred_check
    _
  $region43: #{_rnn_forward_impl.1} parent=0 // pred_check_branch
    %2106 = sbr.rel (0) target = $region45
  $region44: #{_rnn_forward_impl.1} parent=0 // pred_region
    _
  $region45: #{_rnn_forward_impl.1} parent=0 // pred_fallthru
    _

</llo_original>
